<compile_context>
chip_gen: v7x
topology: tpu7x:2x2x1
jax: 0.10.0
libtpu: 0.0.40
codegen_flags: <defaults>
</compile_context>

<pallas_src>
import jax
import jax.numpy as jnp
from jax import lax
from jax.experimental import pallas as pl
from jax.experimental.pallas import tpu as pltpu

# ----------------------------- synthetic T5 config (small) -----------------------------
VOCAB = 512
D_MODEL = 32
NUM_HEADS = 4
D_KV = 8
INNER = NUM_HEADS * D_KV          # 32
D_FF = 64
NUM_LAYERS = 2
MAX_LEN = 8                       # "max_length" of the embedder (small for demo)
REL_BUCKETS = 32
REL_MAX_DIST = 128
EPS = 1e-6


# --------------------------------- fused encoder kernel ---------------------------------
def _rms(x, w):
    """T5 LayerNorm (RMSNorm, no mean subtraction, no bias) — f32 statistics."""
    var = jnp.mean(x * x, axis=-1, keepdims=True)
    return x * lax.rsqrt(var + EPS) * w


def _encoder_kernel(x_ref, bias_ref, ln1_ref, wqkv_ref, wo_ref, ln2_ref,
                    wi_ref, woff_ref, fln_ref, o_ref):
    """Grid = (batch_tile, layer).  o_ref (constant block index over the layer axis)
    doubles as the VMEM-resident hidden-state carry; HBM writeback happens once per
    batch tile."""
    l = pl.program_id(1)

    @pl.when(l == 0)
    def _():
        o_ref[0] = x_ref[0]            # load embedded tokens into the carry

    x = o_ref[0]                       # (S, D) f32, resident in VMEM

    # ---------------- self-attention sub-block ----------------
    h = _rms(x, ln1_ref[0])                                               # (S, D) f32
    qkv = jnp.dot(h.astype(jnp.bfloat16), wqkv_ref[0],
                  preferred_element_type=jnp.float32)                     # (S, 3*INNER) f32

    def split_heads(mat):
        # (S, INNER) f32 -> (H, S, d_kv) bf16; single head split, stacked on the
        # leading axis so all downstream attention math is head-batched.
        return jnp.stack(
            [mat[:, hd * D_KV:(hd + 1) * D_KV] for hd in range(NUM_HEADS)],
            axis=0).astype(jnp.bfloat16)

    q = split_heads(qkv[:, 0:INNER])
    k = split_heads(qkv[:, INNER:2 * INNER])
    v = split_heads(qkv[:, 2 * INNER:3 * INNER])

    # T5 does NOT scale scores by 1/sqrt(d_kv); shared relative-position bias added.
    s = jnp.einsum('hqd,hkd->hqk', q, k,
                   preferred_element_type=jnp.float32) + bias_ref[...]    # (H, S, S) f32
    s = s - jnp.max(s, axis=-1, keepdims=True)
    p = jnp.exp(s)
    p = p * pl.reciprocal(jnp.sum(p, axis=-1, keepdims=True), approx=True)

    ctx = jnp.einsum('hqk,hkd->hqd', p.astype(jnp.bfloat16), v,
                     preferred_element_type=jnp.float32)                  # (H, S, d_kv) f32
    # Head-batched output projection against head-split Wo, summed over heads
    # == concat(ctx) @ Wo.  TODO(synk): at real d_kv (64, lane-alignable) merge heads
    # and use one full-depth (S, INNER) @ (INNER, D) matmul instead.
    proj = jnp.einsum('hqd,hde->hqe', ctx.astype(jnp.bfloat16), wo_ref[0],
                      preferred_element_type=jnp.float32)                 # (H, S, D) f32
    x = x + jnp.sum(proj, axis=0)                                         # residual in f32

    # ---------------- gated-GELU FFN sub-block ----------------
    h2 = _rms(x, ln2_ref[0])
    hw = jnp.dot(h2.astype(jnp.bfloat16), wi_ref[0],
                 preferred_element_type=jnp.float32)                      # (S, 2*D_FF) f32
    hg = hw[:, 0:D_FF]                 # gate path
    hl = hw[:, D_FF:2 * D_FF]          # linear path
    c = jnp.float32(0.7978845608028654)  # sqrt(2/pi), T5 v1.1 "gelu_new"
    g = 0.5 * hg * (1.0 + jnp.tanh(c * (hg + 0.044715 * (hg * hg * hg))))
    ff = jnp.dot((g * hl).astype(jnp.bfloat16), woff_ref[0],
                 preferred_element_type=jnp.float32)                      # (S, D) f32
    x = x + ff

    last = l == pl.num_programs(1) - 1

    @pl.when(jnp.logical_not(last))
    def _():
        o_ref[0] = x                   # carry to next layer (stays in VMEM)

    @pl.when(last)
    def _():
        o_ref[0] = _rms(x, fln_ref[...])   # final RMSNorm; single HBM writeback per tile


def t5_encoder_pallas(x_emb, pos_bias, layers, final_ln):
    """x_emb: (B, S, D) f32; pos_bias: (H, S, S) f32; layers: dict of stacked bf16 weights."""
    B, S, D = x_emb.shape
    # TODO(synk): at real sizes add N/K weight tiling grid axes and per-generation
    # vmem_limit / pl.Buffered depths (see header notes).
    out = pl.pallas_call(
        _encoder_kernel,
        out_shape=jax.ShapeDtypeStruct((B, S, D), jnp.float32),
        grid=(B, NUM_LAYERS),
        in_specs=[
            pl.BlockSpec((1, S, D), lambda b, l: (b, 0, 0)),                 # embedded tokens
            pl.BlockSpec((NUM_HEADS, S, S), lambda b, l: (0, 0, 0)),         # pos bias (resident)
            pl.BlockSpec((1, 1, D), lambda b, l: (l, 0, 0)),                 # ln1
            pl.BlockSpec((1, D, 3 * INNER), lambda b, l: (l, 0, 0)),         # fused Wq|Wk|Wv (bf16)
            pl.BlockSpec((1, NUM_HEADS, D_KV, D), lambda b, l: (l, 0, 0, 0)),  # head-split Wo (bf16)
            pl.BlockSpec((1, 1, D), lambda b, l: (l, 0, 0)),                 # ln2
            pl.BlockSpec((1, D, 2 * D_FF), lambda b, l: (l, 0, 0)),          # fused Wi0|Wi1 (bf16)
            pl.BlockSpec((1, D_FF, D), lambda b, l: (l, 0, 0)),              # Wo_ff (bf16)
            pl.BlockSpec((1, D), lambda b, l: (0, 0)),                       # final LN weight
        ],
        out_specs=pl.BlockSpec((1, S, D), lambda b, l: (b, 0, 0)),           # output == layer carry
        compiler_params=pltpu.CompilerParams(
            dimension_semantics=("parallel", "arbitrary"),   # batch tiles parallel, layers serial
            vmem_limit_bytes=64 * 1024 * 1024),
    )(x_emb, pos_bias,
      layers["ln1"], layers["wqkv"], layers["wo"],
      layers["ln2"], layers["wi"], layers["wo_ff"],
      final_ln)
    return out


# ------------------- T5 relative position bias (plain-JAX glue, computed once) -------------------
def _relative_position_bucket(relative_position, num_buckets=REL_BUCKETS,
                              max_distance=REL_MAX_DIST):
    # bidirectional (encoder)
    num_buckets = num_buckets // 2
    ret = (relative_position > 0).astype(jnp.int32) * num_buckets
    n = jnp.abs(relative_position)
    max_exact = num_buckets // 2
    is_small = n < max_exact
    n_clamped = jnp.maximum(n, 1).astype(jnp.float32)
    val_if_large = max_exact + (
        jnp.log(n_clamped / max_exact)
        / jnp.log(max_distance / max_exact)
        * (num_buckets - max_exact)
    ).astype(jnp.int32)
    val_if_large = jnp.minimum(val_if_large, num_buckets - 1)
    ret = ret + jnp.where(is_small, n, val_if_large)
    return ret


def compute_position_bias(seq_len, rel_bias_table):
    """rel_bias_table: (REL_BUCKETS, H) -> (H, S, S) float32 bias (shared by all layers)."""
    context = jnp.arange(seq_len)[:, None]
    memory = jnp.arange(seq_len)[None, :]
    rel_pos = memory - context                       # (S, S)
    buckets = _relative_position_bucket(rel_pos)     # (S, S)
    bias = rel_bias_table[buckets]                   # (S, S, H) gather (glue)
    return jnp.transpose(bias, (2, 0, 1)).astype(jnp.float32)


# --------------------------------- parameter init ---------------------------------
def init_params(key):
    def nrm(k, shape, scale=0.05, dtype=jnp.float32):
        return (scale * jax.random.normal(k, shape, dtype=jnp.float32)).astype(dtype)

    k_emb, k_rel, k_qkv, k_o, k_wi, k_off = jax.random.split(key, 6)
    params = {
        "embed": nrm(k_emb, (VOCAB, D_MODEL), scale=1.0),
        "rel_bias": nrm(k_rel, (REL_BUCKETS, NUM_HEADS), scale=0.1),
        "final_ln": jnp.ones((1, D_MODEL), jnp.float32),
        # Per-layer weights stacked along a leading layer dim, stored bf16 (MXU-native);
        # Wq|Wk|Wv and Wi0|Wi1 fused; Wo stored head-split (L, H, d_kv, D) so the kernel's
        # head-batched projection consumes it directly (same math as the (INNER, D) layout).
        "layers": {
            "ln1": jnp.ones((NUM_LAYERS, 1, D_MODEL), jnp.float32),
            "wqkv": nrm(k_qkv, (NUM_LAYERS, D_MODEL, 3 * INNER), dtype=jnp.bfloat16),
            "wo": nrm(k_o, (NUM_LAYERS, NUM_HEADS, D_KV, D_MODEL), dtype=jnp.bfloat16),
            "ln2": jnp.ones((NUM_LAYERS, 1, D_MODEL), jnp.float32),
            "wi": nrm(k_wi, (NUM_LAYERS, D_MODEL, 2 * D_FF), dtype=jnp.bfloat16),
            "wo_ff": nrm(k_off, (NUM_LAYERS, D_FF, D_MODEL), dtype=jnp.bfloat16),
        },
    }
    return params


# --------------------------------- forward pass ---------------------------------
def frozen_t5_embedder_forward(tokens, params):
    """tokens: (B, S) int32 -> last_hidden_state (B, S, D_MODEL) float32."""
    # TODO(synk): the HuggingFace T5Tokenizer (text -> input_ids) has no tensor-compute
    # equivalent; this function starts from token ids (module passes no attention_mask).
    S = tokens.shape[1]
    x = params["embed"][tokens]                                  # (B, S, D) gather (glue)
    pos_bias = compute_position_bias(S, params["rel_bias"])      # (H, S, S), shared by layers
    return t5_encoder_pallas(x, pos_bias, params["layers"], params["final_ln"])


# --------------------------------- main ---------------------------------
if __name__ == "__main__":
    key = jax.random.PRNGKey(0)
    k_params, k_tok = jax.random.split(key)
    params = init_params(k_params)

    batch = 2
    tokens = jax.random.randint(k_tok, (batch, MAX_LEN), 1, VOCAB, dtype=jnp.int32)

    z = frozen_t5_embedder_forward(tokens, params)
    z = jax.block_until_ready(z)

    assert z.shape == (batch, MAX_LEN, D_MODEL)
    assert z.dtype == jnp.float32
    assert bool(jnp.all(jnp.isfinite(z)))
    print("KERNEL_OK")
</pallas_src>

<mosaic_0001>
module attributes {stable_mosaic.version = 11 : i64} {
  func.func @_encoder_kernel(%arg0: i32, %arg1: i32, %arg2: memref<1x8x32xf32, #tpu.memory_space<vmem>>, %arg3: memref<4x8x8xf32, #tpu.memory_space<vmem>>, %arg4: memref<1x1x32xf32, #tpu.memory_space<vmem>>, %arg5: memref<1x32x96xbf16, #tpu.memory_space<vmem>>, %arg6: memref<1x4x8x32xbf16, #tpu.memory_space<vmem>>, %arg7: memref<1x1x32xf32, #tpu.memory_space<vmem>>, %arg8: memref<1x32x128xbf16, #tpu.memory_space<vmem>>, %arg9: memref<1x64x32xbf16, #tpu.memory_space<vmem>>, %arg10: memref<1x32xf32, #tpu.memory_space<vmem>>, %arg11: memref<1x8x32xf32, #tpu.memory_space<vmem>>) attributes {dimension_semantics = [#tpu.dimension_semantics<parallel>, #tpu.dimension_semantics<arbitrary>], iteration_bounds = array<i64: 2, 2>, scalar_prefetch = 0 : i64, scratch_operands = 0 : i64, tpu.core_type = #tpu.core_type<tc>, window_params = [{transform_indices = @transform_0, window_bounds = array<i64: 1, 8, 32>}, {pipeline_mode = #tpu.pipeline_mode<synchronous>, transform_indices = @transform_1, window_bounds = array<i64: 4, 8, 8>}, {transform_indices = @transform_2, window_bounds = array<i64: 1, 1, 32>}, {transform_indices = @transform_3, window_bounds = array<i64: 1, 32, 96>}, {transform_indices = @transform_4, window_bounds = array<i64: 1, 4, 8, 32>}, {transform_indices = @transform_5, window_bounds = array<i64: 1, 1, 32>}, {transform_indices = @transform_6, window_bounds = array<i64: 1, 32, 128>}, {transform_indices = @transform_7, window_bounds = array<i64: 1, 64, 32>}, {pipeline_mode = #tpu.pipeline_mode<synchronous>, transform_indices = @transform_8, window_bounds = array<i64: 1, 32>}, {transform_indices = @transform_9, window_bounds = array<i64: 1, 8, 32>}]} {
    %c0_i32 = arith.constant 0 : i32
    %0 = arith.cmpi eq, %arg1, %c0_i32 : i32
    %1 = arith.extui %0 : i1 to i32
    %c0_i32_0 = arith.constant 0 : i32
    %2 = arith.cmpi ne, %1, %c0_i32_0 : i32
    scf.if %2 {
      %c0_45 = arith.constant 0 : index
      %c0_46 = arith.constant 0 : index
      %c0_47 = arith.constant 0 : index
      %122 = vector.load %arg2[%c0_45, %c0_46, %c0_47] : memref<1x8x32xf32, #tpu.memory_space<vmem>>, vector<1x8x32xf32>
      %123 = vector.shape_cast %122 : vector<1x8x32xf32> to vector<8x32xf32>
      %c0_48 = arith.constant 0 : index
      %c0_49 = arith.constant 0 : index
      %c0_50 = arith.constant 0 : index
      %124 = vector.load %arg11[%c0_48, %c0_49, %c0_50] : memref<1x8x32xf32, #tpu.memory_space<vmem>>, vector<1x8x32xf32>
      %125 = vector.shape_cast %124 : vector<1x8x32xf32> to vector<8x32xf32>
      %126 = vector.shape_cast %123 : vector<8x32xf32> to vector<1x8x32xf32>
      tpu.vector_store %arg11[%c0_48, %c0_49, %c0_50], %126 {strides = array<i32>} : memref<1x8x32xf32, #tpu.memory_space<vmem>>, vector<1x8x32xf32>,
    } else {
    }
    %c0 = arith.constant 0 : index
    %c0_1 = arith.constant 0 : index
    %c0_2 = arith.constant 0 : index
    %3 = vector.load %arg11[%c0, %c0_1, %c0_2] : memref<1x8x32xf32, #tpu.memory_space<vmem>>, vector<1x8x32xf32>
    %4 = vector.shape_cast %3 : vector<1x8x32xf32> to vector<8x32xf32>
    %c0_3 = arith.constant 0 : index
    %c0_4 = arith.constant 0 : index
    %c0_5 = arith.constant 0 : index
    %5 = vector.load %arg4[%c0_3, %c0_4, %c0_5] : memref<1x1x32xf32, #tpu.memory_space<vmem>>, vector<1x1x32xf32>
    %6 = vector.shape_cast %5 : vector<1x1x32xf32> to vector<1x32xf32>
    %7 = arith.mulf %4, %4 : vector<8x32xf32>
    %cst = arith.constant dense<0.000000e+00> : vector<8xf32>
    %8 = vector.multi_reduction <add>, %7, %cst [1] : vector<8x32xf32> to vector<8xf32>
    %9 = vector.shape_cast %8 : vector<8xf32> to vector<8x1xf32>
    %cst_6 = arith.constant 3.200000e+01 : f32
    %10 = vector.broadcast %cst_6 : f32 to vector<8x1xf32>
    %11 = arith.divf %9, %10 : vector<8x1xf32>
    %cst_7 = arith.constant 9.99999997E-7 : f32
    %12 = vector.broadcast %cst_7 : f32 to vector<8x1xf32>
    %13 = arith.addf %11, %12 : vector<8x1xf32>
    %14 = math.rsqrt %13 : vector<8x1xf32>
    %15 = vector.broadcast %14 : vector<8x1xf32> to vector<8x32xf32>
    %16 = arith.mulf %4, %15 : vector<8x32xf32>
    %17 = vector.broadcast %6 : vector<1x32xf32> to vector<8x32xf32>
    %18 = arith.mulf %16, %17 : vector<8x32xf32>
    %19 = arith.truncf %18 : vector<8x32xf32> to vector<8x32xbf16>
    %c0_8 = arith.constant 0 : index
    %c0_9 = arith.constant 0 : index
    %c0_10 = arith.constant 0 : index
    %20 = vector.load %arg5[%c0_8, %c0_9, %c0_10] : memref<1x32x96xbf16, #tpu.memory_space<vmem>>, vector<1x32x96xbf16>
    %21 = vector.shape_cast %20 : vector<1x32x96xbf16> to vector<32x96xbf16>
    %cst_11 = arith.constant dense<0.000000e+00> : vector<8x96xf32>
    %22 = tpu.matmul %19, %21, %cst_11 {dimension_numbers = #tpu.dot_dimension_numbers<[1], [0], [0], [1], [0, 0, 1, 1], [], []>} : vector<8x32xbf16>, vector<32x96xbf16>, vector<8x96xf32> -> vector<8x96xf32>
    %23 = vector.extract_strided_slice %22 {offsets = [0, 0], sizes = [8, 32], strides = [1, 1]} : vector<8x96xf32> to vector<8x32xf32>
    %24 = vector.extract_strided_slice %23 {offsets = [0, 0], sizes = [8, 8], strides = [1, 1]} : vector<8x32xf32> to vector<8x8xf32>
    %25 = vector.extract_strided_slice %23 {offsets = [0, 8], sizes = [8, 8], strides = [1, 1]} : vector<8x32xf32> to vector<8x8xf32>
    %26 = vector.extract_strided_slice %23 {offsets = [0, 16], sizes = [8, 8], strides = [1, 1]} : vector<8x32xf32> to vector<8x8xf32>
    %27 = vector.extract_strided_slice %23 {offsets = [0, 24], sizes = [8, 8], strides = [1, 1]} : vector<8x32xf32> to vector<8x8xf32>
    %28 = vector.shape_cast %24 : vector<8x8xf32> to vector<1x8x8xf32>
    %29 = vector.shape_cast %25 : vector<8x8xf32> to vector<1x8x8xf32>
    %30 = vector.shape_cast %26 : vector<8x8xf32> to vector<1x8x8xf32>
    %31 = vector.shape_cast %27 : vector<8x8xf32> to vector<1x8x8xf32>
    %32 = tpu.concatenate %28, %29, %30, %31 in 0 : vector<1x8x8xf32>, vector<1x8x8xf32>, vector<1x8x8xf32>, vector<1x8x8xf32> -> vector<4x8x8xf32>
    %33 = arith.truncf %32 : vector<4x8x8xf32> to vector<4x8x8xbf16>
    %34 = vector.extract_strided_slice %22 {offsets = [0, 32], sizes = [8, 32], strides = [1, 1]} : vector<8x96xf32> to vector<8x32xf32>
    %35 = vector.extract_strided_slice %34 {offsets = [0, 0], sizes = [8, 8], strides = [1, 1]} : vector<8x32xf32> to vector<8x8xf32>
    %36 = vector.extract_strided_slice %34 {offsets = [0, 8], sizes = [8, 8], strides = [1, 1]} : vector<8x32xf32> to vector<8x8xf32>
    %37 = vector.extract_strided_slice %34 {offsets = [0, 16], sizes = [8, 8], strides = [1, 1]} : vector<8x32xf32> to vector<8x8xf32>
    %38 = vector.extract_strided_slice %34 {offsets = [0, 24], sizes = [8, 8], strides = [1, 1]} : vector<8x32xf32> to vector<8x8xf32>
    %39 = vector.shape_cast %35 : vector<8x8xf32> to vector<1x8x8xf32>
    %40 = vector.shape_cast %36 : vector<8x8xf32> to vector<1x8x8xf32>
    %41 = vector.shape_cast %37 : vector<8x8xf32> to vector<1x8x8xf32>
    %42 = vector.shape_cast %38 : vector<8x8xf32> to vector<1x8x8xf32>
    %43 = tpu.concatenate %39, %40, %41, %42 in 0 : vector<1x8x8xf32>, vector<1x8x8xf32>, vector<1x8x8xf32>, vector<1x8x8xf32> -> vector<4x8x8xf32>
    %44 = arith.truncf %43 : vector<4x8x8xf32> to vector<4x8x8xbf16>
    %45 = vector.extract_strided_slice %22 {offsets = [0, 64], sizes = [8, 32], strides = [1, 1]} : vector<8x96xf32> to vector<8x32xf32>
    %46 = vector.extract_strided_slice %45 {offsets = [0, 0], sizes = [8, 8], strides = [1, 1]} : vector<8x32xf32> to vector<8x8xf32>
    %47 = vector.extract_strided_slice %45 {offsets = [0, 8], sizes = [8, 8], strides = [1, 1]} : vector<8x32xf32> to vector<8x8xf32>
    %48 = vector.extract_strided_slice %45 {offsets = [0, 16], sizes = [8, 8], strides = [1, 1]} : vector<8x32xf32> to vector<8x8xf32>
    %49 = vector.extract_strided_slice %45 {offsets = [0, 24], sizes = [8, 8], strides = [1, 1]} : vector<8x32xf32> to vector<8x8xf32>
    %50 = vector.shape_cast %46 : vector<8x8xf32> to vector<1x8x8xf32>
    %51 = vector.shape_cast %47 : vector<8x8xf32> to vector<1x8x8xf32>
    %52 = vector.shape_cast %48 : vector<8x8xf32> to vector<1x8x8xf32>
    %53 = vector.shape_cast %49 : vector<8x8xf32> to vector<1x8x8xf32>
    %54 = tpu.concatenate %50, %51, %52, %53 in 0 : vector<1x8x8xf32>, vector<1x8x8xf32>, vector<1x8x8xf32>, vector<1x8x8xf32> -> vector<4x8x8xf32>
    %55 = arith.truncf %54 : vector<4x8x8xf32> to vector<4x8x8xbf16>
    "tpu.trace_start"() <{level = 10 : i32, message = "hqd,hkd->hqk"}> : () -> ()
    %cst_12 = arith.constant dense<0.000000e+00> : vector<4x8x8xf32>
    %56 = tpu.matmul %33, %44, %cst_12 {dimension_numbers = #tpu.dot_dimension_numbers<[2], [2], [1], [1], [0, 0, 0, 1, 1, 1], [0], [0]>} : vector<4x8x8xbf16>, vector<4x8x8xbf16>, vector<4x8x8xf32> -> vector<4x8x8xf32>
    "tpu.trace_stop"() : () -> ()
    %c0_13 = arith.constant 0 : index
    %c0_14 = arith.constant 0 : index
    %c0_15 = arith.constant 0 : index
    %57 = vector.load %arg3[%c0_13, %c0_14, %c0_15] : memref<4x8x8xf32, #tpu.memory_space<vmem>>, vector<4x8x8xf32>
    %58 = arith.addf %56, %57 : vector<4x8x8xf32>
    %cst_16 = arith.constant dense<0xFF800000> : vector<4x8xf32>
    %59 = vector.multi_reduction <maximumf>, %58, %cst_16 [2] : vector<4x8x8xf32> to vector<4x8xf32>
    %60 = vector.shape_cast %59 : vector<4x8xf32> to vector<4x8x1xf32>
    %61 = vector.broadcast %60 : vector<4x8x1xf32> to vector<4x8x8xf32>
    %62 = arith.subf %58, %61 : vector<4x8x8xf32>
    %63 = math.exp %62 : vector<4x8x8xf32>
    %cst_17 = arith.constant dense<0.000000e+00> : vector<4x8xf32>
    %64 = vector.multi_reduction <add>, %63, %cst_17 [2] : vector<4x8x8xf32> to vector<4x8xf32>
    %65 = vector.shape_cast %64 : vector<4x8xf32> to vector<4x8x1xf32>
    %66 = tpu.reciprocal %65 {approx = true} : vector<4x8x1xf32> -> vector<4x8x1xf32>
    %67 = vector.broadcast %66 : vector<4x8x1xf32> to vector<4x8x8xf32>
    %68 = arith.mulf %63, %67 : vector<4x8x8xf32>
    %69 = arith.truncf %68 : vector<4x8x8xf32> to vector<4x8x8xbf16>
    "tpu.trace_start"() <{level = 10 : i32, message = "hqk,hkd->hqd"}> : () -> ()
    %cst_18 = arith.constant dense<0.000000e+00> : vector<4x8x8xf32>
    %70 = tpu.matmul %69, %55, %cst_18 {dimension_numbers = #tpu.dot_dimension_numbers<[2], [1], [1], [2], [0, 0, 0, 1, 1, 2], [0], [0]>} : vector<4x8x8xbf16>, vector<4x8x8xbf16>, vector<4x8x8xf32> -> vector<4x8x8xf32>
    "tpu.trace_stop"() : () -> ()
    %71 = arith.truncf %70 : vector<4x8x8xf32> to vector<4x8x8xbf16>
    %c0_19 = arith.constant 0 : index
    %c0_20 = arith.constant 0 : index
    %c0_21 = arith.constant 0 : index
    %c0_22 = arith.constant 0 : index
    %72 = vector.load %arg6[%c0_19, %c0_20, %c0_21, %c0_22] : memref<1x4x8x32xbf16, #tpu.memory_space<vmem>>, vector<1x4x8x32xbf16>
    %73 = vector.shape_cast %72 : vector<1x4x8x32xbf16> to vector<4x8x32xbf16>
    "tpu.trace_start"() <{level = 10 : i32, message = "hqd,hde->hqe"}> : () -> ()
    %cst_23 = arith.constant dense<0.000000e+00> : vector<4x8x32xf32>
    %74 = tpu.matmul %71, %73, %cst_23 {dimension_numbers = #tpu.dot_dimension_numbers<[2], [1], [1], [2], [0, 0, 0, 1, 1, 2], [0], [0]>} : vector<4x8x8xbf16>, vector<4x8x32xbf16>, vector<4x8x32xf32> -> vector<4x8x32xf32>
    "tpu.trace_stop"() : () -> ()
    %cst_24 = arith.constant dense<0.000000e+00> : vector<8x32xf32>
    %75 = vector.multi_reduction <add>, %74, %cst_24 [0] : vector<4x8x32xf32> to vector<8x32xf32>
    %76 = arith.addf %4, %75 : vector<8x32xf32>
    %c0_25 = arith.constant 0 : index
    %c0_26 = arith.constant 0 : index
    %c0_27 = arith.constant 0 : index
    %77 = vector.load %arg7[%c0_25, %c0_26, %c0_27] : memref<1x1x32xf32, #tpu.memory_space<vmem>>, vector<1x1x32xf32>
    %78 = vector.shape_cast %77 : vector<1x1x32xf32> to vector<1x32xf32>
    %79 = arith.mulf %76, %76 : vector<8x32xf32>
    %cst_28 = arith.constant dense<0.000000e+00> : vector<8xf32>
    %80 = vector.multi_reduction <add>, %79, %cst_28 [1] : vector<8x32xf32> to vector<8xf32>
    %81 = vector.shape_cast %80 : vector<8xf32> to vector<8x1xf32>
    %cst_29 = arith.constant 3.200000e+01 : f32
    %82 = vector.broadcast %cst_29 : f32 to vector<8x1xf32>
    %83 = arith.divf %81, %82 : vector<8x1xf32>
    %cst_30 = arith.constant 9.99999997E-7 : f32
    %84 = vector.broadcast %cst_30 : f32 to vector<8x1xf32>
    %85 = arith.addf %83, %84 : vector<8x1xf32>
    %86 = math.rsqrt %85 : vector<8x1xf32>
    %87 = vector.broadcast %86 : vector<8x1xf32> to vector<8x32xf32>
    %88 = arith.mulf %76, %87 : vector<8x32xf32>
    %89 = vector.broadcast %78 : vector<1x32xf32> to vector<8x32xf32>
    %90 = arith.mulf %88, %89 : vector<8x32xf32>
    %91 = arith.truncf %90 : vector<8x32xf32> to vector<8x32xbf16>
    %c0_31 = arith.constant 0 : index
    %c0_32 = arith.constant 0 : index
    %c0_33 = arith.constant 0 : index
    %92 = vector.load %arg8[%c0_31, %c0_32, %c0_33] : memref<1x32x128xbf16, #tpu.memory_space<vmem>>, vector<1x32x128xbf16>
    %93 = vector.shape_cast %92 : vector<1x32x128xbf16> to vector<32x128xbf16>
    %cst_34 = arith.constant dense<0.000000e+00> : vector<8x128xf32>
    %94 = tpu.matmul %91, %93, %cst_34 {dimension_numbers = #tpu.dot_dimension_numbers<[1], [0], [0], [1], [0, 0, 1, 1], [], []>} : vector<8x32xbf16>, vector<32x128xbf16>, vector<8x128xf32> -> vector<8x128xf32>
    %95 = vector.extract_strided_slice %94 {offsets = [0, 0], sizes = [8, 64], strides = [1, 1]} : vector<8x128xf32> to vector<8x64xf32>
    %96 = vector.extract_strided_slice %94 {offsets = [0, 64], sizes = [8, 64], strides = [1, 1]} : vector<8x128xf32> to vector<8x64xf32>
    %cst_35 = arith.constant 5.000000e-01 : f32
    %97 = vector.broadcast %cst_35 : f32 to vector<8x64xf32>
    %98 = arith.mulf %97, %95 : vector<8x64xf32>
    %99 = arith.mulf %95, %95 : vector<8x64xf32>
    %100 = arith.mulf %99, %95 : vector<8x64xf32>
    %cst_36 = arith.constant 4.471500e-02 : f32
    %101 = vector.broadcast %cst_36 : f32 to vector<8x64xf32>
    %102 = arith.mulf %101, %100 : vector<8x64xf32>
    %103 = arith.addf %95, %102 : vector<8x64xf32>
    %cst_37 = arith.constant 0.797884583 : f32
    %104 = vector.broadcast %cst_37 : f32 to vector<8x64xf32>
    %105 = arith.mulf %104, %103 : vector<8x64xf32>
    %106 = math.tanh %105 : vector<8x64xf32>
    %cst_38 = arith.constant 1.000000e+00 : f32
    %107 = vector.broadcast %cst_38 : f32 to vector<8x64xf32>
    %108 = arith.addf %107, %106 : vector<8x64xf32>
    %109 = arith.mulf %98, %108 : vector<8x64xf32>
    %110 = arith.mulf %109, %96 : vector<8x64xf32>
    %111 = arith.truncf %110 : vector<8x64xf32> to vector<8x64xbf16>
    %c0_39 = arith.constant 0 : index
    %c0_40 = arith.constant 0 : index
    %c0_41 = arith.constant 0 : index
    %112 = vector.load %arg9[%c0_39, %c0_40, %c0_41] : memref<1x64x32xbf16, #tpu.memory_space<vmem>>, vector<1x64x32xbf16>
    %113 = vector.shape_cast %112 : vector<1x64x32xbf16> to vector<64x32xbf16>
    %cst_42 = arith.constant dense<0.000000e+00> : vector<8x32xf32>
    %114 = tpu.matmul %111, %113, %cst_42 {dimension_numbers = #tpu.dot_dimension_numbers<[1], [0], [0], [1], [0, 0, 1, 1], [], []>} : vector<8x64xbf16>, vector<64x32xbf16>, vector<8x32xf32> -> vector<8x32xf32>
    %115 = arith.addf %76, %114 : vector<8x32xf32>
    %c1_i32 = arith.constant 1 : i32
    %116 = arith.cmpi eq, %arg1, %c1_i32 : i32
    %true = arith.constant true
    %117 = arith.xori %116, %true : i1
    %118 = arith.extui %117 : i1 to i32
    %c0_i32_43 = arith.constant 0 : i32
    %119 = arith.cmpi ne, %118, %c0_i32_43 : i32
    scf.if %119 {
      %c0_45 = arith.constant 0 : index
      %c0_46 = arith.constant 0 : index
      %c0_47 = arith.constant 0 : index
      %122 = vector.load %arg11[%c0_45, %c0_46, %c0_47] : memref<1x8x32xf32, #tpu.memory_space<vmem>>, vector<1x8x32xf32>
      %123 = vector.shape_cast %122 : vector<1x8x32xf32> to vector<8x32xf32>
      %124 = vector.shape_cast %115 : vector<8x32xf32> to vector<1x8x32xf32>
      tpu.vector_store %arg11[%c0_45, %c0_46, %c0_47], %124 {strides = array<i32>} : memref<1x8x32xf32, #tpu.memory_space<vmem>>, vector<1x8x32xf32>,
    } else {
    }
    %120 = arith.extui %116 : i1 to i32
    %c0_i32_44 = arith.constant 0 : i32
    %121 = arith.cmpi ne, %120, %c0_i32_44 : i32
    scf.if %121 {
      %c0_45 = arith.constant 0 : index
      %c0_46 = arith.constant 0 : index
      %122 = vector.load %arg10[%c0_45, %c0_46] : memref<1x32xf32, #tpu.memory_space<vmem>>, vector<1x32xf32>
      %123 = arith.mulf %115, %115 : vector<8x32xf32>
      %cst_47 = arith.constant dense<0.000000e+00> : vector<8xf32>
      %124 = vector.multi_reduction <add>, %123, %cst_47 [1] : vector<8x32xf32> to vector<8xf32>
      %125 = vector.shape_cast %124 : vector<8xf32> to vector<8x1xf32>
      %cst_48 = arith.constant 3.200000e+01 : f32
      %126 = vector.broadcast %cst_48 : f32 to vector<8x1xf32>
      %127 = arith.divf %125, %126 : vector<8x1xf32>
      %cst_49 = arith.constant 9.99999997E-7 : f32
      %128 = vector.broadcast %cst_49 : f32 to vector<8x1xf32>
      %129 = arith.addf %127, %128 : vector<8x1xf32>
      %130 = math.rsqrt %129 : vector<8x1xf32>
      %131 = vector.broadcast %130 : vector<8x1xf32> to vector<8x32xf32>
      %132 = arith.mulf %115, %131 : vector<8x32xf32>
      %133 = vector.broadcast %122 : vector<1x32xf32> to vector<8x32xf32>
      %134 = arith.mulf %132, %133 : vector<8x32xf32>
      %c0_50 = arith.constant 0 : index
      %c0_51 = arith.constant 0 : index
      %c0_52 = arith.constant 0 : index
      %135 = vector.load %arg11[%c0_50, %c0_51, %c0_52] : memref<1x8x32xf32, #tpu.memory_space<vmem>>, vector<1x8x32xf32>
      %136 = vector.shape_cast %135 : vector<1x8x32xf32> to vector<8x32xf32>
      %137 = vector.shape_cast %134 : vector<8x32xf32> to vector<1x8x32xf32>
      tpu.vector_store %arg11[%c0_50, %c0_51, %c0_52], %137 {strides = array<i32>} : memref<1x8x32xf32, #tpu.memory_space<vmem>>, vector<1x8x32xf32>,
    } else {
    }
    return
  }
  func.func @transform_0(%arg0: i32, %arg1: i32) -> (i32, i32, i32) {
    %c0_i32 = arith.constant 0 : i32
    %c0_i32_0 = arith.constant 0 : i32
    %c0_i32_1 = arith.constant 0 : i32
    return %arg0, %c0_i32, %c0_i32_0 : i32, i32, i32
  }
  func.func @transform_1(%arg0: i32, %arg1: i32) -> (i32, i32, i32) {
    %c0_i32 = arith.constant 0 : i32
    %c0_i32_0 = arith.constant 0 : i32
    %c0_i32_1 = arith.constant 0 : i32
    %c0_i32_2 = arith.constant 0 : i32
    return %c0_i32, %c0_i32_0, %c0_i32_1 : i32, i32, i32
  }
  func.func @transform_2(%arg0: i32, %arg1: i32) -> (i32, i32, i32) {
    %c0_i32 = arith.constant 0 : i32
    %c0_i32_0 = arith.constant 0 : i32
    %c0_i32_1 = arith.constant 0 : i32
    return %arg1, %c0_i32, %c0_i32_0 : i32, i32, i32
  }
  func.func @transform_3(%arg0: i32, %arg1: i32) -> (i32, i32, i32) {
    %c0_i32 = arith.constant 0 : i32
    %c0_i32_0 = arith.constant 0 : i32
    %c0_i32_1 = arith.constant 0 : i32
    return %arg1, %c0_i32, %c0_i32_0 : i32, i32, i32
  }
  func.func @transform_4(%arg0: i32, %arg1: i32) -> (i32, i32, i32, i32) {
    %c0_i32 = arith.constant 0 : i32
    %c0_i32_0 = arith.constant 0 : i32
    %c0_i32_1 = arith.constant 0 : i32
    %c0_i32_2 = arith.constant 0 : i32
    return %arg1, %c0_i32, %c0_i32_0, %c0_i32_1 : i32, i32, i32, i32
  }
  func.func @transform_5(%arg0: i32, %arg1: i32) -> (i32, i32, i32) {
    %c0_i32 = arith.constant 0 : i32
    %c0_i32_0 = arith.constant 0 : i32
    %c0_i32_1 = arith.constant 0 : i32
    return %arg1, %c0_i32, %c0_i32_0 : i32, i32, i32
  }
  func.func @transform_6(%arg0: i32, %arg1: i32) -> (i32, i32, i32) {
    %c0_i32 = arith.constant 0 : i32
    %c0_i32_0 = arith.constant 0 : i32
    %c0_i32_1 = arith.constant 0 : i32
    return %arg1, %c0_i32, %c0_i32_0 : i32, i32, i32
  }
  func.func @transform_7(%arg0: i32, %arg1: i32) -> (i32, i32, i32) {
    %c0_i32 = arith.constant 0 : i32
    %c0_i32_0 = arith.constant 0 : i32
    %c0_i32_1 = arith.constant 0 : i32
    return %arg1, %c0_i32, %c0_i32_0 : i32, i32, i32
  }
  func.func @transform_8(%arg0: i32, %arg1: i32) -> (i32, i32) {
    %c0_i32 = arith.constant 0 : i32
    %c0_i32_0 = arith.constant 0 : i32
    %c0_i32_1 = arith.constant 0 : i32
    return %c0_i32, %c0_i32_0 : i32, i32
  }
  func.func @transform_9(%arg0: i32, %arg1: i32) -> (i32, i32, i32) {
    %c0_i32 = arith.constant 0 : i32
    %c0_i32_0 = arith.constant 0 : i32
    %c0_i32_1 = arith.constant 0 : i32
    return %arg0, %c0_i32, %c0_i32_0 : i32, i32, i32
  }
}

</mosaic_0001>

<llo_original>
// kernel: tpu_custom_call.1
$region0: #{tpu_custom_call.1}
  #allocation0 [shape = 'u32[]', space=smem, size = 0x4, offset = 0x4, fixed_abs, tag = 'smem constant byte address 0x4 - core index']
  #allocation1 [shape = 'u32[144,128]{1,0:T(1,128)}', space=vmem, size = 0x12000, scoped, tag = 'internal scratch']
  %s0 = inlined_call_operand.hbm [shape: f32[2,8,32], index: 0, kind: input, shape index: {}]
  %s1 = inlined_call_operand.hbm [shape: f32[4,8,8], index: 1, kind: input, shape index: {}]
  %s2 = inlined_call_operand.hbm [shape: f32[2,1,32], index: 2, kind: input, shape index: {}]
  %s3 = inlined_call_operand.hbm [shape: bf16[2,32,96], index: 3, kind: input, shape index: {}]
  %s4 = inlined_call_operand.hbm [shape: bf16[2,4,8,32], index: 4, kind: input, shape index: {}]
  %s5 = inlined_call_operand.hbm [shape: f32[2,1,32], index: 5, kind: input, shape index: {}]
  %s6 = inlined_call_operand.hbm [shape: bf16[2,32,128], index: 6, kind: input, shape index: {}]
  %s7 = inlined_call_operand.hbm [shape: bf16[2,64,32], index: 7, kind: input, shape index: {}]
  %s8 = inlined_call_operand.hbm [shape: f32[1,32], index: 8, kind: input, shape index: {}]
  %s9 = inlined_call_operand.hbm [shape: f32[2,8,32], index: 9, kind: output, shape index: {}]
  %s10 = sld [smem:[#allocation0]]
  $region117: #{tpu_custom_call.1} parent=0
    _
  %s12 = ssub.s32 1, %s10
  %s13 = scalar_select 0, %s12, %s10
  $region1: #{tpu_custom_call.1} parent=0
    #allocation2 [shape = 'u8[8192]{0}', space=vmem, size = 0x2000, scoped, tag = 'input window, operand 0']
    #allocation3 [shape = 's32[2]{0}', space=sflag, size = 0x8, scoped, tag = 'scoped memory for tpu_custom_call.1']
    #allocation4 [shape = 's32[2]{0}', space=sflag, size = 0x8, scoped, tag = 'scoped memory for tpu_custom_call.1']
    #allocation5 [shape = 'u8[16384]{0}', space=vmem, size = 0x4000, scoped, tag = 'input window, operand 1, single buffered']
    #allocation6 [shape = 's32[1]{0}', space=sflag, size = 0x4, scoped, tag = 'scoped memory for tpu_custom_call.1']
    #allocation7 [shape = 'u8[1024]{0}', space=vmem, size = 0x400, scoped, tag = 'input window, operand 2']
    #allocation8 [shape = 'u8[16384]{0}', space=vmem, size = 0x4000, scoped, tag = 'input window, operand 3']
    #allocation9 [shape = 'u8[16384]{0}', space=vmem, size = 0x4000, scoped, tag = 'input window, operand 4']
    #allocation10 [shape = 'u8[1024]{0}', space=vmem, size = 0x400, scoped, tag = 'input window, operand 5']
    #allocation11 [shape = 'u8[16384]{0}', space=vmem, size = 0x4000, scoped, tag = 'input window, operand 6']
    #allocation12 [shape = 'u8[32768]{0}', space=vmem, size = 0x8000, scoped, tag = 'input window, operand 7']
    #allocation13 [shape = 'u8[512]{0}', space=vmem, size = 0x400, scoped, tag = 'input window, operand 8, single buffered']
    #allocation14 [shape = 'u8[8192]{0}', space=vmem, size = 0x2000, scoped, tag = 'output window, operand 0']
    %14 = vsyncpa [#allocation3], 0
    %s15 = scalar_lea.sflag [#allocation3], 1
    %16 = vsyncpa %s15, 0
    %17 = vsyncpa [#allocation6], 0
    %18 = vsyncpa [#allocation4], 0
    %s19 = scalar_lea.sflag [#allocation4], 1
    %20 = vsyncpa %s19, 0
    loop: start=0, step=1, limit=6
    $region2: #{tpu_custom_call.1} parent=1 // loop_pre_header
      _
    $region3: #{tpu_custom_call.1} parent=1 // loop_header
      %s22 = sphi 0, %s26
      %p23 = scmp.ge.s32.totalorder %s22, 6
      %s29 = sphi 0, %s41
      %s30 = sphi 0, %s37
      %s31 = sphi 0, %s29
      %s32 = sphi 0, %s30
      %s33 = sphi 0, %s31
      %s34 = sphi 0, %s32
      %s44 = sphi 0, %s46
      %s47 = sphi 0, %s44
      %s48 = sphi 0, %s47
      %s64 = sphi 0, %s48
      %s68 = sphi 0, %s68
      %s70 = sphi 0, %s68
      %s71 = sphi 0, %s70
      %s85 = sphi 0, %s71
      %s91 = sphi 0, %s93
      %s94 = sphi 0, %s91
      %s95 = sphi 0, %s94
      %s111 = sphi 0, %s95
      %s117 = sphi 0, %s119
      %s120 = sphi 0, %s117
      %s121 = sphi 0, %s120
      %s137 = sphi 0, %s121
      %s143 = sphi 0, %s145
      %s146 = sphi 0, %s143
      %s147 = sphi 0, %s146
      %s163 = sphi 0, %s147
      %s169 = sphi 0, %s171
      %s172 = sphi 0, %s169
      %s173 = sphi 0, %s172
      %s189 = sphi 0, %s173
      %s195 = sphi 0, %s197
      %s198 = sphi 0, %s195
      %s199 = sphi 0, %s198
      %s215 = sphi 0, %s199
      %s221 = sphi 0, %s223
      %s224 = sphi 0, %s221
      %s225 = sphi 0, %s224
      %s241 = sphi 0, %s225
      %s245 = sphi 0, %s245
      %s247 = sphi 0, %s245
      %s248 = sphi 0, %s247
      %s262 = sphi 0, %s248
      %s268 = sphi 0, %s270
      %s271 = sphi 0, %s268
      %s272 = sphi 0, %s271
      %s288 = sphi 0, %s272
    $region4: #{tpu_custom_call.1} parent=1 // loop_header_branch
      %25 = sbr.rel (%p23) target = $region8
    $region5: #{tpu_custom_call.1} parent=1 // loop_body
      %s27 = ssub.s32 %s22, 1
      %s28 = ssub.s32 %s22, 2
      %s35 = sadd.s32 1, %s30
      %p36 = scmp.ge.s32.totalorder %s35, 2
      %s37 = scalar_select %p36, 0, %s35
      %s38 = sadd.s32 1, %s29
      %s39 = scalar_select %p36, %s38, %s29
      %p40 = scmp.ge.s32.totalorder %s39, 2
      %s41 = scalar_select %p40, 0, %s39
      %s42 = ssub.s32 %s29, %s41
      %p43 = scmp.eq.s32.totalorder %s42, 0
      %s45 = sadd.s32 %s44, 1
      %s46 = scalar_select %p43, %s44, %s45
      %p49 = pneg %p43
      %p50 = scmp.eq.s32.totalorder %s22, 3
      %p51 = por %p49, %p50
      %p52 = scmp.ne.s32.totalorder %s44, %s47
      %p53 = scmp.eq.s32.totalorder %s22, 0
      %p54 = por %p52, %p53
      %p55 = scmp.ne.s32.totalorder %s44, %s47
      %p56 = scmp.eq.s32.totalorder %s27, 3
      %p57 = por %p55, %p56
      %p58 = scmp.ne.s32.totalorder %s47, %s48
      %p59 = scmp.eq.s32.totalorder %s27, 0
      %p60 = por %p58, %p59
      %p61 = scmp.ne.s32.totalorder %s47, %s48
      %p62 = scmp.eq.s32.totalorder %s28, 3
      %p63 = por %p61, %p62
      %p65 = scmp.ne.s32.totalorder %s48, %s64
      %p66 = scmp.eq.s32.totalorder %s28, 0
      %p67 = por %p65, %p66
      %s69 = sadd.s32 %s68, 1
      %p72 = scmp.eq.s32.totalorder %s22, 3
      %p73 = scmp.ne.s32.totalorder %s68, %s70
      %p74 = scmp.eq.s32.totalorder %s22, 0
      %p75 = por %p73, %p74
      %p76 = scmp.ne.s32.totalorder %s68, %s70
      %p77 = scmp.eq.s32.totalorder %s27, 3
      %p78 = por %p76, %p77
      %p79 = scmp.ne.s32.totalorder %s70, %s71
      %p80 = scmp.eq.s32.totalorder %s27, 0
      %p81 = por %p79, %p80
      %p82 = scmp.ne.s32.totalorder %s70, %s71
      %p83 = scmp.eq.s32.totalorder %s28, 3
      %p84 = por %p82, %p83
      %p86 = scmp.ne.s32.totalorder %s71, %s85
      %p87 = scmp.eq.s32.totalorder %s28, 0
      %p88 = por %p86, %p87
      %s89 = ssub.s32 %s30, %s37
      %p90 = scmp.eq.s32.totalorder %s89, 0
      %s92 = sadd.s32 %s91, 1
      %s93 = scalar_select %p90, %s91, %s92
      %p96 = pneg %p90
      %p97 = scmp.eq.s32.totalorder %s22, 3
      %p98 = por %p96, %p97
      %p99 = scmp.ne.s32.totalorder %s91, %s94
      %p100 = scmp.eq.s32.totalorder %s22, 0
      %p101 = por %p99, %p100
      %p102 = scmp.ne.s32.totalorder %s91, %s94
      %p103 = scmp.eq.s32.totalorder %s27, 3
      %p104 = por %p102, %p103
      %p105 = scmp.ne.s32.totalorder %s94, %s95
      %p106 = scmp.eq.s32.totalorder %s27, 0
      %p107 = por %p105, %p106
      %p108 = scmp.ne.s32.totalorder %s94, %s95
      %p109 = scmp.eq.s32.totalorder %s28, 3
      %p110 = por %p108, %p109
      %p112 = scmp.ne.s32.totalorder %s95, %s111
      %p113 = scmp.eq.s32.totalorder %s28, 0
      %p114 = por %p112, %p113
      %s115 = ssub.s32 %s30, %s37
      %p116 = scmp.eq.s32.totalorder %s115, 0
      %s118 = sadd.s32 %s117, 1
      %s119 = scalar_select %p116, %s117, %s118
      %p122 = pneg %p116
      %p123 = scmp.eq.s32.totalorder %s22, 3
      %p124 = por %p122, %p123
      %p125 = scmp.ne.s32.totalorder %s117, %s120
      %p126 = scmp.eq.s32.totalorder %s22, 0
      %p127 = por %p125, %p126
      %p128 = scmp.ne.s32.totalorder %s117, %s120
      %p129 = scmp.eq.s32.totalorder %s27, 3
      %p130 = por %p128, %p129
      %p131 = scmp.ne.s32.totalorder %s120, %s121
      %p132 = scmp.eq.s32.totalorder %s27, 0
      %p133 = por %p131, %p132
      %p134 = scmp.ne.s32.totalorder %s120, %s121
      %p135 = scmp.eq.s32.totalorder %s28, 3
      %p136 = por %p134, %p135
      %p138 = scmp.ne.s32.totalorder %s121, %s137
      %p139 = scmp.eq.s32.totalorder %s28, 0
      %p140 = por %p138, %p139
      %s141 = ssub.s32 %s30, %s37
      %p142 = scmp.eq.s32.totalorder %s141, 0
      %s144 = sadd.s32 %s143, 1
      %s145 = scalar_select %p142, %s143, %s144
      %p148 = pneg %p142
      %p149 = scmp.eq.s32.totalorder %s22, 3
      %p150 = por %p148, %p149
      %p151 = scmp.ne.s32.totalorder %s143, %s146
      %p152 = scmp.eq.s32.totalorder %s22, 0
      %p153 = por %p151, %p152
      %p154 = scmp.ne.s32.totalorder %s143, %s146
      %p155 = scmp.eq.s32.totalorder %s27, 3
      %p156 = por %p154, %p155
      %p157 = scmp.ne.s32.totalorder %s146, %s147
      %p158 = scmp.eq.s32.totalorder %s27, 0
      %p159 = por %p157, %p158
      %p160 = scmp.ne.s32.totalorder %s146, %s147
      %p161 = scmp.eq.s32.totalorder %s28, 3
      %p162 = por %p160, %p161
      %p164 = scmp.ne.s32.totalorder %s147, %s163
      %p165 = scmp.eq.s32.totalorder %s28, 0
      %p166 = por %p164, %p165
      %s167 = ssub.s32 %s30, %s37
      %p168 = scmp.eq.s32.totalorder %s167, 0
      %s170 = sadd.s32 %s169, 1
      %s171 = scalar_select %p168, %s169, %s170
      %p174 = pneg %p168
      %p175 = scmp.eq.s32.totalorder %s22, 3
      %p176 = por %p174, %p175
      %p177 = scmp.ne.s32.totalorder %s169, %s172
      %p178 = scmp.eq.s32.totalorder %s22, 0
      %p179 = por %p177, %p178
      %p180 = scmp.ne.s32.totalorder %s169, %s172
      %p181 = scmp.eq.s32.totalorder %s27, 3
      %p182 = por %p180, %p181
      %p183 = scmp.ne.s32.totalorder %s172, %s173
      %p184 = scmp.eq.s32.totalorder %s27, 0
      %p185 = por %p183, %p184
      %p186 = scmp.ne.s32.totalorder %s172, %s173
      %p187 = scmp.eq.s32.totalorder %s28, 3
      %p188 = por %p186, %p187
      %p190 = scmp.ne.s32.totalorder %s173, %s189
      %p191 = scmp.eq.s32.totalorder %s28, 0
      %p192 = por %p190, %p191
      %s193 = ssub.s32 %s30, %s37
      %p194 = scmp.eq.s32.totalorder %s193, 0
      %s196 = sadd.s32 %s195, 1
      %s197 = scalar_select %p194, %s195, %s196
      %p200 = pneg %p194
      %p201 = scmp.eq.s32.totalorder %s22, 3
      %p202 = por %p200, %p201
      %p203 = scmp.ne.s32.totalorder %s195, %s198
      %p204 = scmp.eq.s32.totalorder %s22, 0
      %p205 = por %p203, %p204
      %p206 = scmp.ne.s32.totalorder %s195, %s198
      %p207 = scmp.eq.s32.totalorder %s27, 3
      %p208 = por %p206, %p207
      %p209 = scmp.ne.s32.totalorder %s198, %s199
      %p210 = scmp.eq.s32.totalorder %s27, 0
      %p211 = por %p209, %p210
      %p212 = scmp.ne.s32.totalorder %s198, %s199
      %p213 = scmp.eq.s32.totalorder %s28, 3
      %p214 = por %p212, %p213
      %p216 = scmp.ne.s32.totalorder %s199, %s215
      %p217 = scmp.eq.s32.totalorder %s28, 0
      %p218 = por %p216, %p217
      %s219 = ssub.s32 %s30, %s37
      %p220 = scmp.eq.s32.totalorder %s219, 0
      %s222 = sadd.s32 %s221, 1
      %s223 = scalar_select %p220, %s221, %s222
      %p226 = pneg %p220
      %p227 = scmp.eq.s32.totalorder %s22, 3
      %p228 = por %p226, %p227
      %p229 = scmp.ne.s32.totalorder %s221, %s224
      %p230 = scmp.eq.s32.totalorder %s22, 0
      %p231 = por %p229, %p230
      %p232 = scmp.ne.s32.totalorder %s221, %s224
      %p233 = scmp.eq.s32.totalorder %s27, 3
      %p234 = por %p232, %p233
      %p235 = scmp.ne.s32.totalorder %s224, %s225
      %p236 = scmp.eq.s32.totalorder %s27, 0
      %p237 = por %p235, %p236
      %p238 = scmp.ne.s32.totalorder %s224, %s225
      %p239 = scmp.eq.s32.totalorder %s28, 3
      %p240 = por %p238, %p239
      %p242 = scmp.ne.s32.totalorder %s225, %s241
      %p243 = scmp.eq.s32.totalorder %s28, 0
      %p244 = por %p242, %p243
      %s246 = sadd.s32 %s245, 1
      %p249 = scmp.eq.s32.totalorder %s22, 3
      %p250 = scmp.ne.s32.totalorder %s245, %s247
      %p251 = scmp.eq.s32.totalorder %s22, 0
      %p252 = por %p250, %p251
      %p253 = scmp.ne.s32.totalorder %s245, %s247
      %p254 = scmp.eq.s32.totalorder %s27, 3
      %p255 = por %p253, %p254
      %p256 = scmp.ne.s32.totalorder %s247, %s248
      %p257 = scmp.eq.s32.totalorder %s27, 0
      %p258 = por %p256, %p257
      %p259 = scmp.ne.s32.totalorder %s247, %s248
      %p260 = scmp.eq.s32.totalorder %s28, 3
      %p261 = por %p259, %p260
      %p263 = scmp.ne.s32.totalorder %s248, %s262
      %p264 = scmp.eq.s32.totalorder %s28, 0
      %p265 = por %p263, %p264
      %s266 = ssub.s32 %s29, %s41
      %p267 = scmp.eq.s32.totalorder %s266, 0
      %s269 = sadd.s32 %s268, 1
      %s270 = scalar_select %p267, %s268, %s269
      %p273 = pneg %p267
      %p274 = scmp.eq.s32.totalorder %s22, 3
      %p275 = por %p273, %p274
      %p276 = scmp.ne.s32.totalorder %s268, %s271
      %p277 = scmp.eq.s32.totalorder %s22, 0
      %p278 = por %p276, %p277
      %p279 = scmp.ne.s32.totalorder %s268, %s271
      %p280 = scmp.eq.s32.totalorder %s27, 3
      %p281 = por %p279, %p280
      %p282 = scmp.ne.s32.totalorder %s271, %s272
      %p283 = scmp.eq.s32.totalorder %s27, 0
      %p284 = por %p282, %p283
      %p285 = scmp.ne.s32.totalorder %s271, %s272
      %p286 = scmp.eq.s32.totalorder %s28, 3
      %p287 = por %p285, %p286
      %p289 = scmp.ne.s32.totalorder %s272, %s288
      %p290 = scmp.eq.s32.totalorder %s28, 0
      %p291 = por %p289, %p290
      %p292 = scmp.le.s32.totalorder 1, %s22
      %p293 = scmp.lt.s32.totalorder %s22, 5
      %p294 = pnand %p292, %p293
      %p295 = pneg %p294
      // Predicated region
      $region9: #{tpu_custom_call.1} parent=5 // pred_check
        _
      $region10: #{tpu_custom_call.1} parent=5 // pred_check_branch
        %297 = sbr.rel (%p294) target = $region12
      $region11: #{tpu_custom_call.1} parent=5 // pred_region
        %s298 = ssub.s32 %s22, 1
        // Predicated region
        $region13: #{tpu_custom_call.1} parent=11 // pred_check
          %p299 = pneg %p81
        $region14: #{tpu_custom_call.1} parent=11 // pred_check_branch
          %301 = sbr.rel (%p299) target = $region16
        $region15: #{tpu_custom_call.1} parent=11 // pred_region
          %s303 = ssub.s32 512, 512
          %304 = vsyncadd [#allocation6], %s303
          %s305 = sshll.u32 [#allocation5], 4
          %s306 = int_to_ptr.vmem [resolvable:$true] %s305
          %311 = dma.hbm_to_vmem [thread:$0]  %s1, 512, %s306, [#allocation6], 128, 128, 8
        $region16: #{tpu_custom_call.1} parent=11 // pred_fallthru
          _
        // Predicated region
        $region17: #{tpu_custom_call.1} parent=11 // pred_check
          %p312 = pneg %p258
        $region18: #{tpu_custom_call.1} parent=11 // pred_check_branch
          %314 = sbr.rel (%p312) target = $region20
        $region19: #{tpu_custom_call.1} parent=11 // pred_region
          %s316 = ssub.s32 16, 16
          %317 = vsyncadd [#allocation6], %s316
          %s319 = sshll.u32 [#allocation13], 4
          %s320 = int_to_ptr.vmem [resolvable:$true] %s319
          %322 = dma.hbm_to_vmem [thread:$0]  %s8, 16, %s320, [#allocation6]
        $region20: #{tpu_custom_call.1} parent=11 // pred_fallthru
          _
      $region12: #{tpu_custom_call.1} parent=5 // pred_fallthru
        _
      %p323 = scmp.lt.s32.totalorder %s22, 4
      // Predicated region
      $region21: #{tpu_custom_call.1} parent=5 // pred_check
        %p324 = pneg %p323
      $region22: #{tpu_custom_call.1} parent=5 // pred_check_branch
        %326 = sbr.rel (%p324) target = $region24
      $region23: #{tpu_custom_call.1} parent=5 // pred_region
        // Predicated region
        $region25: #{tpu_custom_call.1} parent=23 // pred_check
          %p327 = pneg %p54
        $region26: #{tpu_custom_call.1} parent=23 // pred_check_branch
          %329 = sbr.rel (%p327) target = $region28
        $region27: #{tpu_custom_call.1} parent=23 // pred_region
          %s330 = sand.u32 %s22, 1
          %s331 = scalar_lea.sflag [#allocation3], %s330
          %s332 = sand.u32 %s44, 1
          %s333 = smul.addr %s332, 8
          %s334 = scalar_lea.vmem [#allocation2], %s333
          %s336 = ssub.s32 128, 128
          %337 = vsyncadd %s331, %s336
          %s338 = smul.addr %s29, 128
          %s339 = scalar_lea.hbm %s0, %s338
          %s341 = sshll.u32 %s334, 4
          %s342 = int_to_ptr.vmem [resolvable:$true] %s341
          %344 = dma.hbm_to_vmem [thread:$0]  %s339, 128, %s342, %s331
        $region28: #{tpu_custom_call.1} parent=23 // pred_fallthru
          _
        // Predicated region
        $region29: #{tpu_custom_call.1} parent=23 // pred_check
          %p345 = pneg %p101
        $region30: #{tpu_custom_call.1} parent=23 // pred_check_branch
          %347 = sbr.rel (%p345) target = $region32
        $region31: #{tpu_custom_call.1} parent=23 // pred_region
          %s348 = sand.u32 %s22, 1
          %s349 = scalar_lea.sflag [#allocation3], %s348
          %s350 = sand.u32 %s91, 1
          %s351 = scalar_lea.vmem [#allocation7], %s350
          %s353 = ssub.s32 16, 16
          %354 = vsyncadd %s349, %s353
          %s355 = smul.addr %s30, 16
          %s356 = scalar_lea.hbm %s2, %s355
          %s358 = sshll.u32 %s351, 4
          %s359 = int_to_ptr.vmem [resolvable:$true] %s358
          %361 = dma.hbm_to_vmem [thread:$0]  %s356, 16, %s359, %s349
        $region32: #{tpu_custom_call.1} parent=23 // pred_fallthru
          _
        // Predicated region
        $region33: #{tpu_custom_call.1} parent=23 // pred_check
          %p362 = pneg %p127
        $region34: #{tpu_custom_call.1} parent=23 // pred_check_branch
          %364 = sbr.rel (%p362) target = $region36
        $region35: #{tpu_custom_call.1} parent=23 // pred_region
          %s365 = sand.u32 %s22, 1
          %s366 = scalar_lea.sflag [#allocation3], %s365
          %s367 = sand.u32 %s117, 1
          %s368 = smul.addr %s367, 16
          %s369 = scalar_lea.vmem [#allocation8], %s368
          %s371 = ssub.s32 256, 256
          %372 = vsyncadd %s366, %s371
          %s373 = smul.addr %s30, 4
          %s374 = smul.addr %s373, 64
          %s375 = scalar_lea.hbm %s3, %s374
          %s376 = sshll.u32 %s369, 4
          %s377 = int_to_ptr.vmem [resolvable:$true] %s376
          %382 = dma.hbm_to_vmem [thread:$0]  %s375, 256, %s377, %s366, 64, 64, 4
        $region36: #{tpu_custom_call.1} parent=23 // pred_fallthru
          _
        // Predicated region
        $region37: #{tpu_custom_call.1} parent=23 // pred_check
          %p383 = pneg %p153
        $region38: #{tpu_custom_call.1} parent=23 // pred_check_branch
          %385 = sbr.rel (%p383) target = $region40
        $region39: #{tpu_custom_call.1} parent=23 // pred_region
          %s386 = sand.u32 %s22, 1
          %s387 = scalar_lea.sflag [#allocation3], %s386
          %s388 = sand.u32 %s143, 1
          %s389 = smul.addr %s388, 16
          %s390 = scalar_lea.vmem [#allocation9], %s389
          %s392 = ssub.s32 256, 256
          %393 = vsyncadd %s387, %s392
          %s394 = smul.addr %s30, 4
          %s395 = smul.addr %s394, 64
          %s396 = scalar_lea.hbm %s4, %s395
          %s397 = sshll.u32 %s390, 4
          %s398 = int_to_ptr.vmem [resolvable:$true] %s397
          %403 = dma.hbm_to_vmem [thread:$0]  %s396, 256, %s398, %s387, 64, 64, 4
        $region40: #{tpu_custom_call.1} parent=23 // pred_fallthru
          _
        // Predicated region
        $region41: #{tpu_custom_call.1} parent=23 // pred_check
          %p404 = pneg %p179
        $region42: #{tpu_custom_call.1} parent=23 // pred_check_branch
          %406 = sbr.rel (%p404) target = $region44
        $region43: #{tpu_custom_call.1} parent=23 // pred_region
          %s407 = sand.u32 %s22, 1
          %s408 = scalar_lea.sflag [#allocation3], %s407
          %s409 = sand.u32 %s169, 1
          %s410 = scalar_lea.vmem [#allocation10], %s409
          %s412 = ssub.s32 16, 16
          %413 = vsyncadd %s408, %s412
          %s414 = smul.addr %s30, 16
          %s415 = scalar_lea.hbm %s5, %s414
          %s417 = sshll.u32 %s410, 4
          %s418 = int_to_ptr.vmem [resolvable:$true] %s417
          %420 = dma.hbm_to_vmem [thread:$0]  %s415, 16, %s418, %s408
        $region44: #{tpu_custom_call.1} parent=23 // pred_fallthru
          _
        // Predicated region
        $region45: #{tpu_custom_call.1} parent=23 // pred_check
          %p421 = pneg %p205
        $region46: #{tpu_custom_call.1} parent=23 // pred_check_branch
          %423 = sbr.rel (%p421) target = $region48
        $region47: #{tpu_custom_call.1} parent=23 // pred_region
          %s424 = sand.u32 %s22, 1
          %s425 = scalar_lea.sflag [#allocation3], %s424
          %s426 = sand.u32 %s195, 1
          %s427 = smul.addr %s426, 16
          %s428 = scalar_lea.vmem [#allocation11], %s427
          %s430 = ssub.s32 256, 256
          %431 = vsyncadd %s425, %s430
          %s432 = smul.addr %s30, 4
          %s433 = smul.addr %s432, 64
          %s434 = scalar_lea.hbm %s6, %s433
          %s435 = sshll.u32 %s428, 4
          %s436 = int_to_ptr.vmem [resolvable:$true] %s435
          %441 = dma.hbm_to_vmem [thread:$0]  %s434, 256, %s436, %s425, 64, 64, 4
        $region48: #{tpu_custom_call.1} parent=23 // pred_fallthru
          _
        // Predicated region
        $region49: #{tpu_custom_call.1} parent=23 // pred_check
          %p442 = pneg %p231
        $region50: #{tpu_custom_call.1} parent=23 // pred_check_branch
          %444 = sbr.rel (%p442) target = $region52
        $region51: #{tpu_custom_call.1} parent=23 // pred_region
          %s445 = sand.u32 %s22, 1
          %s446 = scalar_lea.sflag [#allocation3], %s445
          %s447 = sand.u32 %s221, 1
          %s448 = smul.addr %s447, 32
          %s449 = scalar_lea.vmem [#allocation12], %s448
          %s451 = ssub.s32 512, 512
          %452 = vsyncadd %s446, %s451
          %s453 = smul.addr %s30, 8
          %s454 = smul.addr %s453, 64
          %s455 = scalar_lea.hbm %s7, %s454
          %s456 = sshll.u32 %s449, 4
          %s457 = int_to_ptr.vmem [resolvable:$true] %s456
          %462 = dma.hbm_to_vmem [thread:$0]  %s455, 512, %s457, %s446, 64, 64, 4
        $region52: #{tpu_custom_call.1} parent=23 // pred_fallthru
          _
      $region24: #{tpu_custom_call.1} parent=5 // pred_fallthru
        _
      %p463 = scmp.le.s32.totalorder 1, %s22
      %p464 = scmp.lt.s32.totalorder %s22, 5
      %p465 = pnand %p463, %p464
      %p466 = pneg %p465
      // Predicated region
      $region53: #{tpu_custom_call.1} parent=5 // pred_check
        _
      $region54: #{tpu_custom_call.1} parent=5 // pred_check_branch
        %468 = sbr.rel (%p465) target = $region56
      $region55: #{tpu_custom_call.1} parent=5 // pred_region
        %s469 = ssub.s32 %s22, 1
        %s470 = sand.u32 %s27, 1
        %s471 = scalar_lea.sflag [#allocation3], %s470
        %s472 = sand.u32 %s47, 1
        %s473 = smul.addr %s472, 8
        %s474 = scalar_lea.vmem [#allocation2], %s473
        // Predicated region
        $region57: #{tpu_custom_call.1} parent=55 // pred_check
          %p475 = pneg %p60
        $region58: #{tpu_custom_call.1} parent=55 // pred_check_branch
          %477 = sbr.rel (%p475) target = $region60
        $region59: #{tpu_custom_call.1} parent=55 // pred_region
          %478 = dma.done %s471, 128
        $region60: #{tpu_custom_call.1} parent=55 // pred_fallthru
          _
        // Predicated region
        $region61: #{tpu_custom_call.1} parent=55 // pred_check
          %p479 = pneg %p81
        $region62: #{tpu_custom_call.1} parent=55 // pred_check_branch
          %481 = sbr.rel (%p479) target = $region64
        $region63: #{tpu_custom_call.1} parent=55 // pred_region
          %482 = dma.done [#allocation6], 512
        $region64: #{tpu_custom_call.1} parent=55 // pred_fallthru
          _
        %s483 = sand.u32 %s27, 1
        %s484 = scalar_lea.sflag [#allocation3], %s483
        %s485 = sand.u32 %s94, 1
        %s486 = scalar_lea.vmem [#allocation7], %s485
        // Predicated region
        $region65: #{tpu_custom_call.1} parent=55 // pred_check
          %p487 = pneg %p107
        $region66: #{tpu_custom_call.1} parent=55 // pred_check_branch
          %489 = sbr.rel (%p487) target = $region68
        $region67: #{tpu_custom_call.1} parent=55 // pred_region
          %490 = dma.done %s484, 16
        $region68: #{tpu_custom_call.1} parent=55 // pred_fallthru
          _
        %s491 = sand.u32 %s27, 1
        %s492 = scalar_lea.sflag [#allocation3], %s491
        %s493 = sand.u32 %s120, 1
        %s494 = smul.addr %s493, 16
        %s495 = scalar_lea.vmem [#allocation8], %s494
        // Predicated region
        $region69: #{tpu_custom_call.1} parent=55 // pred_check
          %p496 = pneg %p133
        $region70: #{tpu_custom_call.1} parent=55 // pred_check_branch
          %498 = sbr.rel (%p496) target = $region72
        $region71: #{tpu_custom_call.1} parent=55 // pred_region
          %499 = dma.done %s492, 256
        $region72: #{tpu_custom_call.1} parent=55 // pred_fallthru
          _
        %s500 = sand.u32 %s27, 1
        %s501 = scalar_lea.sflag [#allocation3], %s500
        %s502 = sand.u32 %s146, 1
        %s503 = smul.addr %s502, 16
        %s504 = scalar_lea.vmem [#allocation9], %s503
        // Predicated region
        $region73: #{tpu_custom_call.1} parent=55 // pred_check
          %p505 = pneg %p159
        $region74: #{tpu_custom_call.1} parent=55 // pred_check_branch
          %507 = sbr.rel (%p505) target = $region76
        $region75: #{tpu_custom_call.1} parent=55 // pred_region
          %508 = dma.done %s501, 256
        $region76: #{tpu_custom_call.1} parent=55 // pred_fallthru
          _
        %s509 = sand.u32 %s27, 1
        %s510 = scalar_lea.sflag [#allocation3], %s509
        %s511 = sand.u32 %s172, 1
        %s512 = scalar_lea.vmem [#allocation10], %s511
        // Predicated region
        $region77: #{tpu_custom_call.1} parent=55 // pred_check
          %p513 = pneg %p185
        $region78: #{tpu_custom_call.1} parent=55 // pred_check_branch
          %515 = sbr.rel (%p513) target = $region80
        $region79: #{tpu_custom_call.1} parent=55 // pred_region
          %516 = dma.done %s510, 16
        $region80: #{tpu_custom_call.1} parent=55 // pred_fallthru
          _
        %s517 = sand.u32 %s27, 1
        %s518 = scalar_lea.sflag [#allocation3], %s517
        %s519 = sand.u32 %s198, 1
        %s520 = smul.addr %s519, 16
        %s521 = scalar_lea.vmem [#allocation11], %s520
        // Predicated region
        $region81: #{tpu_custom_call.1} parent=55 // pred_check
          %p522 = pneg %p211
        $region82: #{tpu_custom_call.1} parent=55 // pred_check_branch
          %524 = sbr.rel (%p522) target = $region84
        $region83: #{tpu_custom_call.1} parent=55 // pred_region
          %525 = dma.done %s518, 256
        $region84: #{tpu_custom_call.1} parent=55 // pred_fallthru
          _
        %s526 = sand.u32 %s27, 1
        %s527 = scalar_lea.sflag [#allocation3], %s526
        %s528 = sand.u32 %s224, 1
        %s529 = smul.addr %s528, 32
        %s530 = scalar_lea.vmem [#allocation12], %s529
        // Predicated region
        $region85: #{tpu_custom_call.1} parent=55 // pred_check
          %p531 = pneg %p237
        $region86: #{tpu_custom_call.1} parent=55 // pred_check_branch
          %533 = sbr.rel (%p531) target = $region88
        $region87: #{tpu_custom_call.1} parent=55 // pred_region
          %534 = dma.done %s527, 512
        $region88: #{tpu_custom_call.1} parent=55 // pred_fallthru
          _
        // Predicated region
        $region89: #{tpu_custom_call.1} parent=55 // pred_check
          %p535 = pneg %p258
        $region90: #{tpu_custom_call.1} parent=55 // pred_check_branch
          %537 = sbr.rel (%p535) target = $region92
        $region91: #{tpu_custom_call.1} parent=55 // pred_region
          %538 = dma.done [#allocation6], 16
        $region92: #{tpu_custom_call.1} parent=55 // pred_fallthru
          _
        %s539 = sand.u32 %s27, 1
        %s540 = scalar_lea.sflag [#allocation3], %s539
        %s541 = sand.u32 %s47, 1
        %s542 = smul.addr %s541, 8
        %s543 = scalar_lea.vmem [#allocation2], %s542
        %p544 = pneg %p60
        %p545 = pneg %p57
        %p546 = pneg %p81
        %p547 = pneg %p78
        %s548 = sand.u32 %s27, 1
        %s549 = scalar_lea.sflag [#allocation3], %s548
        %s550 = sand.u32 %s94, 1
        %s551 = scalar_lea.vmem [#allocation7], %s550
        %p552 = pneg %p107
        %p553 = pneg %p104
        %s554 = sand.u32 %s27, 1
        %s555 = scalar_lea.sflag [#allocation3], %s554
        %s556 = sand.u32 %s120, 1
        %s557 = smul.addr %s556, 16
        %s558 = scalar_lea.vmem [#allocation8], %s557
        %p559 = pneg %p133
        %p560 = pneg %p130
        %s561 = sand.u32 %s27, 1
        %s562 = scalar_lea.sflag [#allocation3], %s561
        %s563 = sand.u32 %s146, 1
        %s564 = smul.addr %s563, 16
        %s565 = scalar_lea.vmem [#allocation9], %s564
        %p566 = pneg %p159
        %p567 = pneg %p156
        %s568 = sand.u32 %s27, 1
        %s569 = scalar_lea.sflag [#allocation3], %s568
        %s570 = sand.u32 %s172, 1
        %s571 = scalar_lea.vmem [#allocation10], %s570
        %p572 = pneg %p185
        %p573 = pneg %p182
        %s574 = sand.u32 %s27, 1
        %s575 = scalar_lea.sflag [#allocation3], %s574
        %s576 = sand.u32 %s198, 1
        %s577 = smul.addr %s576, 16
        %s578 = scalar_lea.vmem [#allocation11], %s577
        %p579 = pneg %p211
        %p580 = pneg %p208
        %s581 = sand.u32 %s27, 1
        %s582 = scalar_lea.sflag [#allocation3], %s581
        %s583 = sand.u32 %s224, 1
        %s584 = smul.addr %s583, 32
        %s585 = scalar_lea.vmem [#allocation12], %s584
        %p586 = pneg %p237
        %p587 = pneg %p234
        %p588 = pneg %p258
        %p589 = pneg %p255
        %p590 = pneg %p284
        %p591 = pneg %p281
        %s592 = sand.u32 %s271, 1
        %s593 = scalar_lea.sflag [#allocation4], %s592
        %s594 = sand.u32 %s271, 1
        %s595 = smul.addr %s594, 8
        %s596 = scalar_lea.vmem [#allocation14], %s595
        %p598 = scmp.eq.s32.totalorder %s32, 0
        // Predicated region
        $region93: #{tpu_custom_call.1} parent=55 // pred_check
          %p599 = pneg %p598
        $region94: #{tpu_custom_call.1} parent=55 // pred_check_branch
          %601 = sbr.rel (%p599) target = $region96
        $region95: #{tpu_custom_call.1} parent=55 // pred_region
          %v602 = vld [vmem:[%s474] sm:$0xff]
          %vm603 = vcmask 261120
          %604 = vst.msk [vmem:[%s596] sm:$0xff] %vm603, %v602
        $region96: #{tpu_custom_call.1} parent=55 // pred_fallthru
          _
        %v605 = vld [vmem:[%s596] sm:$0xff]
        %v606 = vld [vmem:[%s486] sm:$0x1]
        %v607 = vmul.f32 %v605, %v605
        %vm608 = vcmask 261120
        %v609 = vsel %vm608, %v607, 0.0
        %610 = vadd.xlane.f32.xlu0 %v609
        %v611 = vpop.xlane.xlu0 %610
        %v612 = vrcp.pop 32.0
        %v613 = vmul.f32 %v611, %v612
        %v614 = vadd.f32 %v613, 1e-06
        %v615 = vrsqrt.pop %v614
        %v616 = vmul.f32 %v605, %v615
        %v618 = vlaneseq
        %v619 = vshrl.u32 %v618, 7
        %v620 = vsub.s32 0, %v619
        %v621 = vrot.slane %v606, %v620
        %v623 = vmul.f32 %v616, %v621
        %v624 = vpack.c.bf16 %v623, %v623
        %v625 = vld [vmem:[%s495] sm:$0xf]
        %v626 = vld [vmem:[%s495 + $0x4] sm:$0xf]
        %v627 = vld [vmem:[%s495 + $0x8] sm:$0xf]
        %v628 = vld [vmem:[%s495 + $0xc] sm:$0xf]
        %v633 = vunpack.c.l.b16 %v625
        %v634 = vunpack.c.l.b16 %v626
        %v635 = vunpack.c.l.b16 %v627
        %v636 = vunpack.c.l.b16 %v628
        %v637 = vpack.c.b16 %v634, %v633
        %v638 = vpack.c.b16 %v636, %v635
        %v642 = vsel %vm608, %v624, 0
        %644 = vmatprep.subr.bf16.mxu0 0
        %645 = vmatpush1.bf16.msra.mxu0 %v637
        %646 = vmatprep.subr.bf16.mxu0 0
        %647 = vmatpush1.bf16.msra.mxu0 %v638
        %648 = vmatprep.subr.bf16.mxu0 0
        %649 = vmatpush1.bf16.msra.mxu0 0
        %650 = vmatprep.subr.bf16.mxu0 0
        %651 = vmatpush1.bf16.msra.mxu0 0
        %652 = vmatprep.subr.bf16.mxu0 0
        %653 = vmatpush1.bf16.msra.mxu0 0
        %654 = vmatprep.subr.bf16.mxu0 0
        %655 = vmatpush1.bf16.msra.mxu0 0
        %656 = vmatprep.subr.bf16.mxu0 0
        %657 = vmatpush1.bf16.msra.mxu0 0
        %658 = vmatprep.subr.bf16.mxu0 0
        %659 = vmatpush1.bf16.msra.mxu0 0
        %660 = vmatprep.subr.bf16.mxu0 0
        %661 = vmatpush1.bf16.msra.mxu0 0
        %662 = vmatprep.subr.bf16.mxu0 0
        %663 = vmatpush1.bf16.msra.mxu0 0
        %664 = vmatprep.subr.bf16.mxu0 0
        %665 = vmatpush1.bf16.msra.mxu0 0
        %666 = vmatprep.subr.bf16.mxu0 0
        %667 = vmatpush1.bf16.msra.mxu0 0
        %668 = vmatprep.subr.bf16.mxu0 0
        %669 = vmatpush1.bf16.msra.mxu0 0
        %670 = vmatprep.subr.bf16.mxu0 0
        %671 = vmatpush1.bf16.msra.mxu0 0
        %672 = vmatprep.subr.bf16.mxu0 0
        %673 = vmatpush1.bf16.msra.mxu0 0
        %674 = vmatprep.subr.bf16.mxu0 0
        %675 = vmatpush1.bf16.msra.mxu0 0
        %676 = vmatprep.mubr.bf16.mxu0 0
        %677 = vmatmul.mubr.bf16.gmra.mrb[0].mxu0 %v642
        %v678 = vpop.f32.mrb[0].mxu0
        %v679 = vadd.f32 0.0, %v678
        %v680 = vpop.f32.mrb[0].mxu0
        %v681 = vpop.f32.mrb[0].mxu0
        %v682 = vpop.f32.mrb[0].mxu0
        %683 = vdwg.mxu0
        %685 = vrot.lane.b32.xlu0 %v679, 120
        %v686 = vpop.permute.xlu0 %685
        %688 = vrot.lane.b32.xlu0 %v679, 112
        %v689 = vpop.permute.xlu0 %688
        %691 = vrot.lane.b32.xlu0 %v679, 104
        %v692 = vpop.permute.xlu0 %691
        %v694 = vpack.c.bf16 %v679, %v679
        %v695 = vpack.c.bf16 %v686, %v686
        %v696 = vpack.c.bf16 %v689, %v689
        %v697 = vpack.c.bf16 %v692, %v692
        %v698 = vld [vmem:[#allocation5] sm:$0xff]
        %v699 = vld [vmem:[#allocation5 + $0x8] sm:$0xff]
        %v700 = vld [vmem:[#allocation5 + $0x10] sm:$0xff]
        %v701 = vld [vmem:[#allocation5 + $0x18] sm:$0xff]
        %703 = vrot.lane.b32.xlu0 %v694, 96
        %v704 = vpop.permute.xlu0 %703
        %vm705 = vcmask 64512
        %v707 = vsel %vm705, %v694, 0
        %v710 = vsel %vm705, %v704, 0
        %712 = vmatprep.subr.bf16.mxu0 0
        %713 = vmatpush1.bf16.xpose.msra.mxu0 %v710
        %714 = vmatprep.subr.bf16.mxu0 0
        %715 = vmatpush1.bf16.xpose.msra.mxu0 0
        %716 = vmatprep.subr.bf16.mxu0 0
        %717 = vmatpush1.bf16.xpose.msra.mxu0 0
        %718 = vmatprep.subr.bf16.mxu0 0
        %719 = vmatpush1.bf16.xpose.msra.mxu0 0
        %720 = vmatprep.subr.bf16.mxu0 0
        %721 = vmatpush1.bf16.xpose.msra.mxu0 0
        %722 = vmatprep.subr.bf16.mxu0 0
        %723 = vmatpush1.bf16.xpose.msra.mxu0 0
        %724 = vmatprep.subr.bf16.mxu0 0
        %725 = vmatpush1.bf16.xpose.msra.mxu0 0
        %726 = vmatprep.subr.bf16.mxu0 0
        %727 = vmatpush1.bf16.xpose.msra.mxu0 0
        %728 = vmatprep.subr.bf16.mxu0 0
        %729 = vmatpush1.bf16.xpose.msra.mxu0 0
        %730 = vmatprep.subr.bf16.mxu0 0
        %731 = vmatpush1.bf16.xpose.msra.mxu0 0
        %732 = vmatprep.subr.bf16.mxu0 0
        %733 = vmatpush1.bf16.xpose.msra.mxu0 0
        %734 = vmatprep.subr.bf16.mxu0 0
        %735 = vmatpush1.bf16.xpose.msra.mxu0 0
        %736 = vmatprep.subr.bf16.mxu0 0
        %737 = vmatpush1.bf16.xpose.msra.mxu0 0
        %738 = vmatprep.subr.bf16.mxu0 0
        %739 = vmatpush1.bf16.xpose.msra.mxu0 0
        %740 = vmatprep.subr.bf16.mxu0 0
        %741 = vmatpush1.bf16.xpose.msra.mxu0 0
        %742 = vmatprep.subr.bf16.mxu0 0
        %743 = vmatpush1.bf16.xpose.msra.mxu0 0
        %744 = vmatprep.mubr.bf16.mxu0 0
        %745 = vmatmul.mubr.bf16.gmra.mrb[0].mxu0 %v707
        %v746 = vpop.f32.mrb[0].mxu0
        %v747 = vadd.f32 %v698, %v746
        %v748 = vpop.f32.mrb[0].mxu0
        %v749 = vpop.f32.mrb[0].mxu0
        %v750 = vpop.f32.mrb[0].mxu0
        %751 = vdwg.mxu0
        %753 = vrot.lane.b32.xlu0 %v695, 96
        %v754 = vpop.permute.xlu0 %753
        %v756 = vsel %vm705, %v695, 0
        %v759 = vsel %vm705, %v754, 0
        %761 = vmatprep.subr.bf16.mxu0 0
        %762 = vmatpush1.bf16.xpose.msra.mxu0 %v759
        %763 = vmatprep.subr.bf16.mxu0 0
        %764 = vmatpush1.bf16.xpose.msra.mxu0 0
        %765 = vmatprep.subr.bf16.mxu0 0
        %766 = vmatpush1.bf16.xpose.msra.mxu0 0
        %767 = vmatprep.subr.bf16.mxu0 0
        %768 = vmatpush1.bf16.xpose.msra.mxu0 0
        %769 = vmatprep.subr.bf16.mxu0 0
        %770 = vmatpush1.bf16.xpose.msra.mxu0 0
        %771 = vmatprep.subr.bf16.mxu0 0
        %772 = vmatpush1.bf16.xpose.msra.mxu0 0
        %773 = vmatprep.subr.bf16.mxu0 0
        %774 = vmatpush1.bf16.xpose.msra.mxu0 0
        %775 = vmatprep.subr.bf16.mxu0 0
        %776 = vmatpush1.bf16.xpose.msra.mxu0 0
        %777 = vmatprep.subr.bf16.mxu0 0
        %778 = vmatpush1.bf16.xpose.msra.mxu0 0
        %779 = vmatprep.subr.bf16.mxu0 0
        %780 = vmatpush1.bf16.xpose.msra.mxu0 0
        %781 = vmatprep.subr.bf16.mxu0 0
        %782 = vmatpush1.bf16.xpose.msra.mxu0 0
        %783 = vmatprep.subr.bf16.mxu0 0
        %784 = vmatpush1.bf16.xpose.msra.mxu0 0
        %785 = vmatprep.subr.bf16.mxu0 0
        %786 = vmatpush1.bf16.xpose.msra.mxu0 0
        %787 = vmatprep.subr.bf16.mxu0 0
        %788 = vmatpush1.bf16.xpose.msra.mxu0 0
        %789 = vmatprep.subr.bf16.mxu0 0
        %790 = vmatpush1.bf16.xpose.msra.mxu0 0
        %791 = vmatprep.subr.bf16.mxu0 0
        %792 = vmatpush1.bf16.xpose.msra.mxu0 0
        %793 = vmatprep.mubr.bf16.mxu0 0
        %794 = vmatmul.mubr.bf16.gmra.mrb[0].mxu0 %v756
        %v795 = vpop.f32.mrb[0].mxu0
        %v796 = vadd.f32 %v699, %v795
        %v797 = vpop.f32.mrb[0].mxu0
        %v798 = vpop.f32.mrb[0].mxu0
        %v799 = vpop.f32.mrb[0].mxu0
        %800 = vdwg.mxu0
        %802 = vrot.lane.b32.xlu0 %v696, 96
        %v803 = vpop.permute.xlu0 %802
        %v805 = vsel %vm705, %v696, 0
        %v808 = vsel %vm705, %v803, 0
        %810 = vmatprep.subr.bf16.mxu0 0
        %811 = vmatpush1.bf16.xpose.msra.mxu0 %v808
        %812 = vmatprep.subr.bf16.mxu0 0
        %813 = vmatpush1.bf16.xpose.msra.mxu0 0
        %814 = vmatprep.subr.bf16.mxu0 0
        %815 = vmatpush1.bf16.xpose.msra.mxu0 0
        %816 = vmatprep.subr.bf16.mxu0 0
        %817 = vmatpush1.bf16.xpose.msra.mxu0 0
        %818 = vmatprep.subr.bf16.mxu0 0
        %819 = vmatpush1.bf16.xpose.msra.mxu0 0
        %820 = vmatprep.subr.bf16.mxu0 0
        %821 = vmatpush1.bf16.xpose.msra.mxu0 0
        %822 = vmatprep.subr.bf16.mxu0 0
        %823 = vmatpush1.bf16.xpose.msra.mxu0 0
        %824 = vmatprep.subr.bf16.mxu0 0
        %825 = vmatpush1.bf16.xpose.msra.mxu0 0
        %826 = vmatprep.subr.bf16.mxu0 0
        %827 = vmatpush1.bf16.xpose.msra.mxu0 0
        %828 = vmatprep.subr.bf16.mxu0 0
        %829 = vmatpush1.bf16.xpose.msra.mxu0 0
        %830 = vmatprep.subr.bf16.mxu0 0
        %831 = vmatpush1.bf16.xpose.msra.mxu0 0
        %832 = vmatprep.subr.bf16.mxu0 0
        %833 = vmatpush1.bf16.xpose.msra.mxu0 0
        %834 = vmatprep.subr.bf16.mxu0 0
        %835 = vmatpush1.bf16.xpose.msra.mxu0 0
        %836 = vmatprep.subr.bf16.mxu0 0
        %837 = vmatpush1.bf16.xpose.msra.mxu0 0
        %838 = vmatprep.subr.bf16.mxu0 0
        %839 = vmatpush1.bf16.xpose.msra.mxu0 0
        %840 = vmatprep.subr.bf16.mxu0 0
        %841 = vmatpush1.bf16.xpose.msra.mxu0 0
        %842 = vmatprep.mubr.bf16.mxu0 0
        %843 = vmatmul.mubr.bf16.gmra.mrb[0].mxu0 %v805
        %v844 = vpop.f32.mrb[0].mxu0
        %v845 = vadd.f32 %v700, %v844
        %v846 = vpop.f32.mrb[0].mxu0
        %v847 = vpop.f32.mrb[0].mxu0
        %v848 = vpop.f32.mrb[0].mxu0
        %849 = vdwg.mxu0
        %851 = vrot.lane.b32.xlu0 %v697, 96
        %v852 = vpop.permute.xlu0 %851
        %v854 = vsel %vm705, %v697, 0
        %v857 = vsel %vm705, %v852, 0
        %859 = vmatprep.subr.bf16.mxu0 0
        %860 = vmatpush1.bf16.xpose.msra.mxu0 %v857
        %861 = vmatprep.subr.bf16.mxu0 0
        %862 = vmatpush1.bf16.xpose.msra.mxu0 0
        %863 = vmatprep.subr.bf16.mxu0 0
        %864 = vmatpush1.bf16.xpose.msra.mxu0 0
        %865 = vmatprep.subr.bf16.mxu0 0
        %866 = vmatpush1.bf16.xpose.msra.mxu0 0
        %867 = vmatprep.subr.bf16.mxu0 0
        %868 = vmatpush1.bf16.xpose.msra.mxu0 0
        %869 = vmatprep.subr.bf16.mxu0 0
        %870 = vmatpush1.bf16.xpose.msra.mxu0 0
        %871 = vmatprep.subr.bf16.mxu0 0
        %872 = vmatpush1.bf16.xpose.msra.mxu0 0
        %873 = vmatprep.subr.bf16.mxu0 0
        %874 = vmatpush1.bf16.xpose.msra.mxu0 0
        %875 = vmatprep.subr.bf16.mxu0 0
        %876 = vmatpush1.bf16.xpose.msra.mxu0 0
        %877 = vmatprep.subr.bf16.mxu0 0
        %878 = vmatpush1.bf16.xpose.msra.mxu0 0
        %879 = vmatprep.subr.bf16.mxu0 0
        %880 = vmatpush1.bf16.xpose.msra.mxu0 0
        %881 = vmatprep.subr.bf16.mxu0 0
        %882 = vmatpush1.bf16.xpose.msra.mxu0 0
        %883 = vmatprep.subr.bf16.mxu0 0
        %884 = vmatpush1.bf16.xpose.msra.mxu0 0
        %885 = vmatprep.subr.bf16.mxu0 0
        %886 = vmatpush1.bf16.xpose.msra.mxu0 0
        %887 = vmatprep.subr.bf16.mxu0 0
        %888 = vmatpush1.bf16.xpose.msra.mxu0 0
        %889 = vmatprep.subr.bf16.mxu0 0
        %890 = vmatpush1.bf16.xpose.msra.mxu0 0
        %891 = vmatprep.mubr.bf16.mxu0 0
        %892 = vmatmul.mubr.bf16.gmra.mrb[0].mxu0 %v854
        %v893 = vpop.f32.mrb[0].mxu0
        %v894 = vadd.f32 %v701, %v893
        %v895 = vpop.f32.mrb[0].mxu0
        %v896 = vpop.f32.mrb[0].mxu0
        %v897 = vpop.f32.mrb[0].mxu0
        %898 = vdwg.mxu0
        %v899 = vsel %vm705, %v747, -inf
        %900 = vmax.xlane.f32.xlu0 %v899
        %v901 = vpop.xlane.xlu0 %900
        %v902 = vsel %vm705, %v796, -inf
        %903 = vmax.xlane.f32.xlu0 %v902
        %v904 = vpop.xlane.xlu0 %903
        %v905 = vsel %vm705, %v845, -inf
        %906 = vmax.xlane.f32.xlu0 %v905
        %v907 = vpop.xlane.xlu0 %906
        %v908 = vsel %vm705, %v894, -inf
        %909 = vmax.xlane.f32.xlu0 %v908
        %v910 = vpop.xlane.xlu0 %909
        %v911 = vsub.f32 %v747, %v901
        %v912 = vsub.f32 %v796, %v904
        %v913 = vsub.f32 %v845, %v907
        %v914 = vsub.f32 %v894, %v910
        %v915 = vmul.f32 %v911, 1.442695
        %v916 = vpow.pop %v915
        %v917 = vmul.f32 %v912, 1.442695
        %v918 = vpow.pop %v917
        %v919 = vmul.f32 %v913, 1.442695
        %v920 = vpow.pop %v919
        %v921 = vmul.f32 %v914, 1.442695
        %v922 = vpow.pop %v921
        %v923 = vsel %vm705, %v916, 0.0
        %924 = vadd.xlane.f32.xlu0 %v923
        %v925 = vpop.xlane.xlu0 %924
        %v926 = vsel %vm705, %v918, 0.0
        %927 = vadd.xlane.f32.xlu0 %v926
        %v928 = vpop.xlane.xlu0 %927
        %v929 = vsel %vm705, %v920, 0.0
        %930 = vadd.xlane.f32.xlu0 %v929
        %v931 = vpop.xlane.xlu0 %930
        %v932 = vsel %vm705, %v922, 0.0
        %933 = vadd.xlane.f32.xlu0 %v932
        %v934 = vpop.xlane.xlu0 %933
        %v935 = vrcp.pop %v925
        %v936 = vrcp.pop %v928
        %v937 = vrcp.pop %v931
        %v938 = vrcp.pop %v934
        %v939 = vmul.f32 %v916, %v935
        %v940 = vmul.f32 %v918, %v936
        %v941 = vmul.f32 %v920, %v937
        %v942 = vmul.f32 %v922, %v938
        %v943 = vpack.c.bf16 %v939, %v939
        %v944 = vpack.c.bf16 %v940, %v940
        %v945 = vpack.c.bf16 %v941, %v941
        %v946 = vpack.c.bf16 %v942, %v942
        %947 = vrot.lane.b32.xlu0 %v694, 64
        %v948 = vpop.permute.xlu0 %947
        %v950 = vsel %vm705, %v943, 0
        %vm952 = vcmask 1043456
        %v954 = vsel %vm952, %v948, 0
        %956 = vmatprep.subr.bf16.mxu0 0
        %957 = vmatpush1.bf16.msra.mxu0 %v954
        %958 = vmatprep.subr.bf16.mxu0 0
        %959 = vmatpush1.bf16.msra.mxu0 0
        %960 = vmatprep.subr.bf16.mxu0 0
        %961 = vmatpush1.bf16.msra.mxu0 0
        %962 = vmatprep.subr.bf16.mxu0 0
        %963 = vmatpush1.bf16.msra.mxu0 0
        %964 = vmatprep.subr.bf16.mxu0 0
        %965 = vmatpush1.bf16.msra.mxu0 0
        %966 = vmatprep.subr.bf16.mxu0 0
        %967 = vmatpush1.bf16.msra.mxu0 0
        %968 = vmatprep.subr.bf16.mxu0 0
        %969 = vmatpush1.bf16.msra.mxu0 0
        %970 = vmatprep.subr.bf16.mxu0 0
        %971 = vmatpush1.bf16.msra.mxu0 0
        %972 = vmatprep.subr.bf16.mxu0 0
        %973 = vmatpush1.bf16.msra.mxu0 0
        %974 = vmatprep.subr.bf16.mxu0 0
        %975 = vmatpush1.bf16.msra.mxu0 0
        %976 = vmatprep.subr.bf16.mxu0 0
        %977 = vmatpush1.bf16.msra.mxu0 0
        %978 = vmatprep.subr.bf16.mxu0 0
        %979 = vmatpush1.bf16.msra.mxu0 0
        %980 = vmatprep.subr.bf16.mxu0 0
        %981 = vmatpush1.bf16.msra.mxu0 0
        %982 = vmatprep.subr.bf16.mxu0 0
        %983 = vmatpush1.bf16.msra.mxu0 0
        %984 = vmatprep.subr.bf16.mxu0 0
        %985 = vmatpush1.bf16.msra.mxu0 0
        %986 = vmatprep.subr.bf16.mxu0 0
        %987 = vmatpush1.bf16.msra.mxu0 0
        %988 = vmatprep.mubr.bf16.mxu0 0
        %989 = vmatmul.mubr.bf16.gmra.mrb[0].mxu0 %v950
        %v990 = vpop.f32.mrb[0].mxu0
        %v991 = vadd.f32 0.0, %v990
        %v992 = vpop.f32.mrb[0].mxu0
        %v993 = vpop.f32.mrb[0].mxu0
        %v994 = vpop.f32.mrb[0].mxu0
        %995 = vdwg.mxu0
        %996 = vrot.lane.b32.xlu0 %v695, 64
        %v997 = vpop.permute.xlu0 %996
        %v999 = vsel %vm705, %v944, 0
        %v1002 = vsel %vm952, %v997, 0
        %1004 = vmatprep.subr.bf16.mxu0 0
        %1005 = vmatpush1.bf16.msra.mxu0 %v1002
        %1006 = vmatprep.subr.bf16.mxu0 0
        %1007 = vmatpush1.bf16.msra.mxu0 0
        %1008 = vmatprep.subr.bf16.mxu0 0
        %1009 = vmatpush1.bf16.msra.mxu0 0
        %1010 = vmatprep.subr.bf16.mxu0 0
        %1011 = vmatpush1.bf16.msra.mxu0 0
        %1012 = vmatprep.subr.bf16.mxu0 0
        %1013 = vmatpush1.bf16.msra.mxu0 0
        %1014 = vmatprep.subr.bf16.mxu0 0
        %1015 = vmatpush1.bf16.msra.mxu0 0
        %1016 = vmatprep.subr.bf16.mxu0 0
        %1017 = vmatpush1.bf16.msra.mxu0 0
        %1018 = vmatprep.subr.bf16.mxu0 0
        %1019 = vmatpush1.bf16.msra.mxu0 0
        %1020 = vmatprep.subr.bf16.mxu0 0
        %1021 = vmatpush1.bf16.msra.mxu0 0
        %1022 = vmatprep.subr.bf16.mxu0 0
        %1023 = vmatpush1.bf16.msra.mxu0 0
        %1024 = vmatprep.subr.bf16.mxu0 0
        %1025 = vmatpush1.bf16.msra.mxu0 0
        %1026 = vmatprep.subr.bf16.mxu0 0
        %1027 = vmatpush1.bf16.msra.mxu0 0
        %1028 = vmatprep.subr.bf16.mxu0 0
        %1029 = vmatpush1.bf16.msra.mxu0 0
        %1030 = vmatprep.subr.bf16.mxu0 0
        %1031 = vmatpush1.bf16.msra.mxu0 0
        %1032 = vmatprep.subr.bf16.mxu0 0
        %1033 = vmatpush1.bf16.msra.mxu0 0
        %1034 = vmatprep.subr.bf16.mxu0 0
        %1035 = vmatpush1.bf16.msra.mxu0 0
        %1036 = vmatprep.mubr.bf16.mxu0 0
        %1037 = vmatmul.mubr.bf16.gmra.mrb[0].mxu0 %v999
        %v1038 = vpop.f32.mrb[0].mxu0
        %v1039 = vadd.f32 0.0, %v1038
        %v1040 = vpop.f32.mrb[0].mxu0
        %v1041 = vpop.f32.mrb[0].mxu0
        %v1042 = vpop.f32.mrb[0].mxu0
        %1043 = vdwg.mxu0
        %1044 = vrot.lane.b32.xlu0 %v696, 64
        %v1045 = vpop.permute.xlu0 %1044
        %v1047 = vsel %vm705, %v945, 0
        %v1050 = vsel %vm952, %v1045, 0
        %1052 = vmatprep.subr.bf16.mxu0 0
        %1053 = vmatpush1.bf16.msra.mxu0 %v1050
        %1054 = vmatprep.subr.bf16.mxu0 0
        %1055 = vmatpush1.bf16.msra.mxu0 0
        %1056 = vmatprep.subr.bf16.mxu0 0
        %1057 = vmatpush1.bf16.msra.mxu0 0
        %1058 = vmatprep.subr.bf16.mxu0 0
        %1059 = vmatpush1.bf16.msra.mxu0 0
        %1060 = vmatprep.subr.bf16.mxu0 0
        %1061 = vmatpush1.bf16.msra.mxu0 0
        %1062 = vmatprep.subr.bf16.mxu0 0
        %1063 = vmatpush1.bf16.msra.mxu0 0
        %1064 = vmatprep.subr.bf16.mxu0 0
        %1065 = vmatpush1.bf16.msra.mxu0 0
        %1066 = vmatprep.subr.bf16.mxu0 0
        %1067 = vmatpush1.bf16.msra.mxu0 0
        %1068 = vmatprep.subr.bf16.mxu0 0
        %1069 = vmatpush1.bf16.msra.mxu0 0
        %1070 = vmatprep.subr.bf16.mxu0 0
        %1071 = vmatpush1.bf16.msra.mxu0 0
        %1072 = vmatprep.subr.bf16.mxu0 0
        %1073 = vmatpush1.bf16.msra.mxu0 0
        %1074 = vmatprep.subr.bf16.mxu0 0
        %1075 = vmatpush1.bf16.msra.mxu0 0
        %1076 = vmatprep.subr.bf16.mxu0 0
        %1077 = vmatpush1.bf16.msra.mxu0 0
        %1078 = vmatprep.subr.bf16.mxu0 0
        %1079 = vmatpush1.bf16.msra.mxu0 0
        %1080 = vmatprep.subr.bf16.mxu0 0
        %1081 = vmatpush1.bf16.msra.mxu0 0
        %1082 = vmatprep.subr.bf16.mxu0 0
        %1083 = vmatpush1.bf16.msra.mxu0 0
        %1084 = vmatprep.mubr.bf16.mxu0 0
        %1085 = vmatmul.mubr.bf16.gmra.mrb[0].mxu0 %v1047
        %v1086 = vpop.f32.mrb[0].mxu0
        %v1087 = vadd.f32 0.0, %v1086
        %v1088 = vpop.f32.mrb[0].mxu0
        %v1089 = vpop.f32.mrb[0].mxu0
        %v1090 = vpop.f32.mrb[0].mxu0
        %1091 = vdwg.mxu0
        %1092 = vrot.lane.b32.xlu0 %v697, 64
        %v1093 = vpop.permute.xlu0 %1092
        %v1095 = vsel %vm705, %v946, 0
        %v1098 = vsel %vm952, %v1093, 0
        %1100 = vmatprep.subr.bf16.mxu0 0
        %1101 = vmatpush1.bf16.msra.mxu0 %v1098
        %1102 = vmatprep.subr.bf16.mxu0 0
        %1103 = vmatpush1.bf16.msra.mxu0 0
        %1104 = vmatprep.subr.bf16.mxu0 0
        %1105 = vmatpush1.bf16.msra.mxu0 0
        %1106 = vmatprep.subr.bf16.mxu0 0
        %1107 = vmatpush1.bf16.msra.mxu0 0
        %1108 = vmatprep.subr.bf16.mxu0 0
        %1109 = vmatpush1.bf16.msra.mxu0 0
        %1110 = vmatprep.subr.bf16.mxu0 0
        %1111 = vmatpush1.bf16.msra.mxu0 0
        %1112 = vmatprep.subr.bf16.mxu0 0
        %1113 = vmatpush1.bf16.msra.mxu0 0
        %1114 = vmatprep.subr.bf16.mxu0 0
        %1115 = vmatpush1.bf16.msra.mxu0 0
        %1116 = vmatprep.subr.bf16.mxu0 0
        %1117 = vmatpush1.bf16.msra.mxu0 0
        %1118 = vmatprep.subr.bf16.mxu0 0
        %1119 = vmatpush1.bf16.msra.mxu0 0
        %1120 = vmatprep.subr.bf16.mxu0 0
        %1121 = vmatpush1.bf16.msra.mxu0 0
        %1122 = vmatprep.subr.bf16.mxu0 0
        %1123 = vmatpush1.bf16.msra.mxu0 0
        %1124 = vmatprep.subr.bf16.mxu0 0
        %1125 = vmatpush1.bf16.msra.mxu0 0
        %1126 = vmatprep.subr.bf16.mxu0 0
        %1127 = vmatpush1.bf16.msra.mxu0 0
        %1128 = vmatprep.subr.bf16.mxu0 0
        %1129 = vmatpush1.bf16.msra.mxu0 0
        %1130 = vmatprep.subr.bf16.mxu0 0
        %1131 = vmatpush1.bf16.msra.mxu0 0
        %1132 = vmatprep.mubr.bf16.mxu0 0
        %1133 = vmatmul.mubr.bf16.gmra.mrb[0].mxu0 %v1095
        %v1134 = vpop.f32.mrb[0].mxu0
        %v1135 = vadd.f32 0.0, %v1134
        %v1136 = vpop.f32.mrb[0].mxu0
        %v1137 = vpop.f32.mrb[0].mxu0
        %v1138 = vpop.f32.mrb[0].mxu0
        %1139 = vdwg.mxu0
        %v1140 = vpack.c.bf16 %v991, %v991
        %v1141 = vpack.c.bf16 %v1039, %v1039
        %v1142 = vpack.c.bf16 %v1087, %v1087
        %v1143 = vpack.c.bf16 %v1135, %v1135
        %v1144 = vld [vmem:[%s504] sm:$0xf]
        %v1145 = vld [vmem:[%s504 + $0x4] sm:$0xf]
        %v1146 = vld [vmem:[%s504 + $0x8] sm:$0xf]
        %v1147 = vld [vmem:[%s504 + $0xc] sm:$0xf]
        %v1149 = vsel %vm705, %v1140, 0
        %v1152 = vsel %vm952, %v1144, 0
        %1154 = vmatprep.subr.bf16.mxu0 0
        %1155 = vmatpush1.bf16.msra.mxu0 %v1152
        %1156 = vmatprep.subr.bf16.mxu0 0
        %1157 = vmatpush1.bf16.msra.mxu0 0
        %1158 = vmatprep.subr.bf16.mxu0 0
        %1159 = vmatpush1.bf16.msra.mxu0 0
        %1160 = vmatprep.subr.bf16.mxu0 0
        %1161 = vmatpush1.bf16.msra.mxu0 0
        %1162 = vmatprep.subr.bf16.mxu0 0
        %1163 = vmatpush1.bf16.msra.mxu0 0
        %1164 = vmatprep.subr.bf16.mxu0 0
        %1165 = vmatpush1.bf16.msra.mxu0 0
        %1166 = vmatprep.subr.bf16.mxu0 0
        %1167 = vmatpush1.bf16.msra.mxu0 0
        %1168 = vmatprep.subr.bf16.mxu0 0
        %1169 = vmatpush1.bf16.msra.mxu0 0
        %1170 = vmatprep.subr.bf16.mxu0 0
        %1171 = vmatpush1.bf16.msra.mxu0 0
        %1172 = vmatprep.subr.bf16.mxu0 0
        %1173 = vmatpush1.bf16.msra.mxu0 0
        %1174 = vmatprep.subr.bf16.mxu0 0
        %1175 = vmatpush1.bf16.msra.mxu0 0
        %1176 = vmatprep.subr.bf16.mxu0 0
        %1177 = vmatpush1.bf16.msra.mxu0 0
        %1178 = vmatprep.subr.bf16.mxu0 0
        %1179 = vmatpush1.bf16.msra.mxu0 0
        %1180 = vmatprep.subr.bf16.mxu0 0
        %1181 = vmatpush1.bf16.msra.mxu0 0
        %1182 = vmatprep.subr.bf16.mxu0 0
        %1183 = vmatpush1.bf16.msra.mxu0 0
        %1184 = vmatprep.subr.bf16.mxu0 0
        %1185 = vmatpush1.bf16.msra.mxu0 0
        %1186 = vmatprep.mubr.bf16.mxu0 0
        %1187 = vmatmul.mubr.bf16.gmra.mrb[0].mxu0 %v1149
        %v1188 = vpop.f32.mrb[0].mxu0
        %v1189 = vadd.f32 0.0, %v1188
        %v1190 = vpop.f32.mrb[0].mxu0
        %v1191 = vpop.f32.mrb[0].mxu0
        %v1192 = vpop.f32.mrb[0].mxu0
        %1193 = vdwg.mxu0
        %v1195 = vsel %vm705, %v1141, 0
        %v1198 = vsel %vm952, %v1145, 0
        %1200 = vmatprep.subr.bf16.mxu0 0
        %1201 = vmatpush1.bf16.msra.mxu0 %v1198
        %1202 = vmatprep.subr.bf16.mxu0 0
        %1203 = vmatpush1.bf16.msra.mxu0 0
        %1204 = vmatprep.subr.bf16.mxu0 0
        %1205 = vmatpush1.bf16.msra.mxu0 0
        %1206 = vmatprep.subr.bf16.mxu0 0
        %1207 = vmatpush1.bf16.msra.mxu0 0
        %1208 = vmatprep.subr.bf16.mxu0 0
        %1209 = vmatpush1.bf16.msra.mxu0 0
        %1210 = vmatprep.subr.bf16.mxu0 0
        %1211 = vmatpush1.bf16.msra.mxu0 0
        %1212 = vmatprep.subr.bf16.mxu0 0
        %1213 = vmatpush1.bf16.msra.mxu0 0
        %1214 = vmatprep.subr.bf16.mxu0 0
        %1215 = vmatpush1.bf16.msra.mxu0 0
        %1216 = vmatprep.subr.bf16.mxu0 0
        %1217 = vmatpush1.bf16.msra.mxu0 0
        %1218 = vmatprep.subr.bf16.mxu0 0
        %1219 = vmatpush1.bf16.msra.mxu0 0
        %1220 = vmatprep.subr.bf16.mxu0 0
        %1221 = vmatpush1.bf16.msra.mxu0 0
        %1222 = vmatprep.subr.bf16.mxu0 0
        %1223 = vmatpush1.bf16.msra.mxu0 0
        %1224 = vmatprep.subr.bf16.mxu0 0
        %1225 = vmatpush1.bf16.msra.mxu0 0
        %1226 = vmatprep.subr.bf16.mxu0 0
        %1227 = vmatpush1.bf16.msra.mxu0 0
        %1228 = vmatprep.subr.bf16.mxu0 0
        %1229 = vmatpush1.bf16.msra.mxu0 0
        %1230 = vmatprep.subr.bf16.mxu0 0
        %1231 = vmatpush1.bf16.msra.mxu0 0
        %1232 = vmatprep.mubr.bf16.mxu0 0
        %1233 = vmatmul.mubr.bf16.gmra.mrb[0].mxu0 %v1195
        %v1234 = vpop.f32.mrb[0].mxu0
        %v1235 = vadd.f32 0.0, %v1234
        %v1236 = vpop.f32.mrb[0].mxu0
        %v1237 = vpop.f32.mrb[0].mxu0
        %v1238 = vpop.f32.mrb[0].mxu0
        %1239 = vdwg.mxu0
        %v1241 = vsel %vm705, %v1142, 0
        %v1244 = vsel %vm952, %v1146, 0
        %1246 = vmatprep.subr.bf16.mxu0 0
        %1247 = vmatpush1.bf16.msra.mxu0 %v1244
        %1248 = vmatprep.subr.bf16.mxu0 0
        %1249 = vmatpush1.bf16.msra.mxu0 0
        %1250 = vmatprep.subr.bf16.mxu0 0
        %1251 = vmatpush1.bf16.msra.mxu0 0
        %1252 = vmatprep.subr.bf16.mxu0 0
        %1253 = vmatpush1.bf16.msra.mxu0 0
        %1254 = vmatprep.subr.bf16.mxu0 0
        %1255 = vmatpush1.bf16.msra.mxu0 0
        %1256 = vmatprep.subr.bf16.mxu0 0
        %1257 = vmatpush1.bf16.msra.mxu0 0
        %1258 = vmatprep.subr.bf16.mxu0 0
        %1259 = vmatpush1.bf16.msra.mxu0 0
        %1260 = vmatprep.subr.bf16.mxu0 0
        %1261 = vmatpush1.bf16.msra.mxu0 0
        %1262 = vmatprep.subr.bf16.mxu0 0
        %1263 = vmatpush1.bf16.msra.mxu0 0
        %1264 = vmatprep.subr.bf16.mxu0 0
        %1265 = vmatpush1.bf16.msra.mxu0 0
        %1266 = vmatprep.subr.bf16.mxu0 0
        %1267 = vmatpush1.bf16.msra.mxu0 0
        %1268 = vmatprep.subr.bf16.mxu0 0
        %1269 = vmatpush1.bf16.msra.mxu0 0
        %1270 = vmatprep.subr.bf16.mxu0 0
        %1271 = vmatpush1.bf16.msra.mxu0 0
        %1272 = vmatprep.subr.bf16.mxu0 0
        %1273 = vmatpush1.bf16.msra.mxu0 0
        %1274 = vmatprep.subr.bf16.mxu0 0
        %1275 = vmatpush1.bf16.msra.mxu0 0
        %1276 = vmatprep.subr.bf16.mxu0 0
        %1277 = vmatpush1.bf16.msra.mxu0 0
        %1278 = vmatprep.mubr.bf16.mxu0 0
        %1279 = vmatmul.mubr.bf16.gmra.mrb[0].mxu0 %v1241
        %v1280 = vpop.f32.mrb[0].mxu0
        %v1281 = vadd.f32 0.0, %v1280
        %v1282 = vpop.f32.mrb[0].mxu0
        %v1283 = vpop.f32.mrb[0].mxu0
        %v1284 = vpop.f32.mrb[0].mxu0
        %1285 = vdwg.mxu0
        %v1287 = vsel %vm705, %v1143, 0
        %v1290 = vsel %vm952, %v1147, 0
        %1292 = vmatprep.subr.bf16.mxu0 0
        %1293 = vmatpush1.bf16.msra.mxu0 %v1290
        %1294 = vmatprep.subr.bf16.mxu0 0
        %1295 = vmatpush1.bf16.msra.mxu0 0
        %1296 = vmatprep.subr.bf16.mxu0 0
        %1297 = vmatpush1.bf16.msra.mxu0 0
        %1298 = vmatprep.subr.bf16.mxu0 0
        %1299 = vmatpush1.bf16.msra.mxu0 0
        %1300 = vmatprep.subr.bf16.mxu0 0
        %1301 = vmatpush1.bf16.msra.mxu0 0
        %1302 = vmatprep.subr.bf16.mxu0 0
        %1303 = vmatpush1.bf16.msra.mxu0 0
        %1304 = vmatprep.subr.bf16.mxu0 0
        %1305 = vmatpush1.bf16.msra.mxu0 0
        %1306 = vmatprep.subr.bf16.mxu0 0
        %1307 = vmatpush1.bf16.msra.mxu0 0
        %1308 = vmatprep.subr.bf16.mxu0 0
        %1309 = vmatpush1.bf16.msra.mxu0 0
        %1310 = vmatprep.subr.bf16.mxu0 0
        %1311 = vmatpush1.bf16.msra.mxu0 0
        %1312 = vmatprep.subr.bf16.mxu0 0
        %1313 = vmatpush1.bf16.msra.mxu0 0
        %1314 = vmatprep.subr.bf16.mxu0 0
        %1315 = vmatpush1.bf16.msra.mxu0 0
        %1316 = vmatprep.subr.bf16.mxu0 0
        %1317 = vmatpush1.bf16.msra.mxu0 0
        %1318 = vmatprep.subr.bf16.mxu0 0
        %1319 = vmatpush1.bf16.msra.mxu0 0
        %1320 = vmatprep.subr.bf16.mxu0 0
        %1321 = vmatpush1.bf16.msra.mxu0 0
        %1322 = vmatprep.subr.bf16.mxu0 0
        %1323 = vmatpush1.bf16.msra.mxu0 0
        %1324 = vmatprep.mubr.bf16.mxu0 0
        %1325 = vmatmul.mubr.bf16.gmra.mrb[0].mxu0 %v1287
        %v1326 = vpop.f32.mrb[0].mxu0
        %v1327 = vadd.f32 0.0, %v1326
        %v1328 = vpop.f32.mrb[0].mxu0
        %v1329 = vpop.f32.mrb[0].mxu0
        %v1330 = vpop.f32.mrb[0].mxu0
        %1331 = vdwg.mxu0
        %v1332 = vsel %vm608, %v1189, 0.0
        %v1333 = vsel %vm608, %v1235, 0.0
        %v1334 = vadd.f32 %v1332, %v1333
        %v1335 = vsel %vm608, %v1281, 0.0
        %v1336 = vadd.f32 %v1334, %v1335
        %v1337 = vsel %vm608, %v1327, 0.0
        %v1338 = vadd.f32 %v1336, %v1337
        %v1339 = vadd.f32 %v605, %v1338
        %v1340 = vld [vmem:[%s512] sm:$0x1]
        %v1341 = vmul.f32 %v1339, %v1339
        %v1342 = vsel %vm608, %v1341, 0.0
        %1343 = vadd.xlane.f32.xlu0 %v1342
        %v1344 = vpop.xlane.xlu0 %1343
        %v1345 = vmul.f32 %v1344, %v612
        %v1346 = vadd.f32 %v1345, 1e-06
        %v1347 = vrsqrt.pop %v1346
        %v1348 = vmul.f32 %v1339, %v1347
        %v1350 = vlaneseq
        %v1351 = vshrl.u32 %v1350, 7
        %v1352 = vsub.s32 0, %v1351
        %v1353 = vrot.slane %v1340, %v1352
        %v1355 = vmul.f32 %v1348, %v1353
        %v1356 = vpack.c.bf16 %v1355, %v1355
        %v1357 = vld [vmem:[%s521] sm:$0xf]
        %v1358 = vld [vmem:[%s521 + $0x4] sm:$0xf]
        %v1359 = vld [vmem:[%s521 + $0x8] sm:$0xf]
        %v1360 = vld [vmem:[%s521 + $0xc] sm:$0xf]
        %v1365 = vunpack.c.l.b16 %v1357
        %v1366 = vunpack.c.l.b16 %v1358
        %v1367 = vunpack.c.l.b16 %v1359
        %v1368 = vunpack.c.l.b16 %v1360
        %v1369 = vpack.c.b16 %v1366, %v1365
        %v1370 = vpack.c.b16 %v1368, %v1367
        %v1374 = vsel %vm608, %v1356, 0
        %1376 = vmatprep.subr.bf16.mxu0 0
        %1377 = vmatpush1.bf16.msra.mxu0 %v1369
        %1378 = vmatprep.subr.bf16.mxu0 0
        %1379 = vmatpush1.bf16.msra.mxu0 %v1370
        %1380 = vmatprep.subr.bf16.mxu0 0
        %1381 = vmatpush1.bf16.msra.mxu0 0
        %1382 = vmatprep.subr.bf16.mxu0 0
        %1383 = vmatpush1.bf16.msra.mxu0 0
        %1384 = vmatprep.subr.bf16.mxu0 0
        %1385 = vmatpush1.bf16.msra.mxu0 0
        %1386 = vmatprep.subr.bf16.mxu0 0
        %1387 = vmatpush1.bf16.msra.mxu0 0
        %1388 = vmatprep.subr.bf16.mxu0 0
        %1389 = vmatpush1.bf16.msra.mxu0 0
        %1390 = vmatprep.subr.bf16.mxu0 0
        %1391 = vmatpush1.bf16.msra.mxu0 0
        %1392 = vmatprep.subr.bf16.mxu0 0
        %1393 = vmatpush1.bf16.msra.mxu0 0
        %1394 = vmatprep.subr.bf16.mxu0 0
        %1395 = vmatpush1.bf16.msra.mxu0 0
        %1396 = vmatprep.subr.bf16.mxu0 0
        %1397 = vmatpush1.bf16.msra.mxu0 0
        %1398 = vmatprep.subr.bf16.mxu0 0
        %1399 = vmatpush1.bf16.msra.mxu0 0
        %1400 = vmatprep.subr.bf16.mxu0 0
        %1401 = vmatpush1.bf16.msra.mxu0 0
        %1402 = vmatprep.subr.bf16.mxu0 0
        %1403 = vmatpush1.bf16.msra.mxu0 0
        %1404 = vmatprep.subr.bf16.mxu0 0
        %1405 = vmatpush1.bf16.msra.mxu0 0
        %1406 = vmatprep.subr.bf16.mxu0 0
        %1407 = vmatpush1.bf16.msra.mxu0 0
        %1408 = vmatprep.mubr.bf16.mxu0 0
        %1409 = vmatmul.mubr.bf16.gmra.mrb[0].mxu0 %v1374
        %v1410 = vpop.f32.mrb[0].mxu0
        %v1411 = vadd.f32 0.0, %v1410
        %v1412 = vpop.f32.mrb[0].mxu0
        %v1413 = vpop.f32.mrb[0].mxu0
        %v1414 = vpop.f32.mrb[0].mxu0
        %1415 = vdwg.mxu0
        %v1416 = vmul.f32 %v1411, 0.5
        %v1417 = vmul.f32 %v1411, %v1411
        %v1418 = vmul.f32 %v1417, %v1411
        %v1419 = vmul.f32 %v1418, 0.044715
        %v1420 = vadd.f32 %v1411, %v1419
        %v1421 = vmul.f32 %v1420, 0.7978846
        %v1422 = vtanh.pop %v1421
        %v1423 = vadd.f32 %v1422, 1.0
        %v1424 = vmul.f32 %v1416, %v1423
        %1426 = vrot.lane.b32.xlu0 %v1411, 64
        %v1427 = vpop.permute.xlu0 %1426
        %v1429 = vmul.f32 %v1424, %v1427
        %v1430 = vpack.c.bf16 %v1429, %v1429
        %v1431 = vld [vmem:[%s530] sm:$0xf]
        %v1432 = vld [vmem:[%s530 + $0x4] sm:$0xf]
        %v1433 = vld [vmem:[%s530 + $0x8] sm:$0xf]
        %v1434 = vld [vmem:[%s530 + $0xc] sm:$0xf]
        %v1435 = vld [vmem:[%s530 + $0x10] sm:$0xf]
        %v1436 = vld [vmem:[%s530 + $0x14] sm:$0xf]
        %v1437 = vld [vmem:[%s530 + $0x18] sm:$0xf]
        %v1438 = vld [vmem:[%s530 + $0x1c] sm:$0xf]
        %v1447 = vunpack.c.l.b16 %v1431
        %v1448 = vunpack.c.l.b16 %v1432
        %v1449 = vunpack.c.l.b16 %v1433
        %v1450 = vunpack.c.l.b16 %v1434
        %v1451 = vunpack.c.l.b16 %v1435
        %v1452 = vunpack.c.l.b16 %v1436
        %v1453 = vunpack.c.l.b16 %v1437
        %v1454 = vunpack.c.l.b16 %v1438
        %v1455 = vpack.c.b16 %v1448, %v1447
        %v1456 = vpack.c.b16 %v1450, %v1449
        %v1457 = vpack.c.b16 %v1452, %v1451
        %v1458 = vpack.c.b16 %v1454, %v1453
        %vm1463 = vcmask 523264
        %v1465 = vsel %vm1463, %v1430, 0
        %1467 = vmatprep.subr.bf16.mxu0 0
        %1468 = vmatpush1.bf16.msra.mxu0 %v1455
        %1469 = vmatprep.subr.bf16.mxu0 0
        %1470 = vmatpush1.bf16.msra.mxu0 %v1456
        %1471 = vmatprep.subr.bf16.mxu0 0
        %1472 = vmatpush1.bf16.msra.mxu0 %v1457
        %1473 = vmatprep.subr.bf16.mxu0 0
        %1474 = vmatpush1.bf16.msra.mxu0 %v1458
        %1475 = vmatprep.subr.bf16.mxu0 0
        %1476 = vmatpush1.bf16.msra.mxu0 0
        %1477 = vmatprep.subr.bf16.mxu0 0
        %1478 = vmatpush1.bf16.msra.mxu0 0
        %1479 = vmatprep.subr.bf16.mxu0 0
        %1480 = vmatpush1.bf16.msra.mxu0 0
        %1481 = vmatprep.subr.bf16.mxu0 0
        %1482 = vmatpush1.bf16.msra.mxu0 0
        %1483 = vmatprep.subr.bf16.mxu0 0
        %1484 = vmatpush1.bf16.msra.mxu0 0
        %1485 = vmatprep.subr.bf16.mxu0 0
        %1486 = vmatpush1.bf16.msra.mxu0 0
        %1487 = vmatprep.subr.bf16.mxu0 0
        %1488 = vmatpush1.bf16.msra.mxu0 0
        %1489 = vmatprep.subr.bf16.mxu0 0
        %1490 = vmatpush1.bf16.msra.mxu0 0
        %1491 = vmatprep.subr.bf16.mxu0 0
        %1492 = vmatpush1.bf16.msra.mxu0 0
        %1493 = vmatprep.subr.bf16.mxu0 0
        %1494 = vmatpush1.bf16.msra.mxu0 0
        %1495 = vmatprep.subr.bf16.mxu0 0
        %1496 = vmatpush1.bf16.msra.mxu0 0
        %1497 = vmatprep.subr.bf16.mxu0 0
        %1498 = vmatpush1.bf16.msra.mxu0 0
        %1499 = vmatprep.mubr.bf16.mxu0 0
        %1500 = vmatmul.mubr.bf16.gmra.mrb[0].mxu0 %v1465
        %v1501 = vpop.f32.mrb[0].mxu0
        %v1502 = vadd.f32 0.0, %v1501
        %v1503 = vpop.f32.mrb[0].mxu0
        %v1504 = vpop.f32.mrb[0].mxu0
        %v1505 = vpop.f32.mrb[0].mxu0
        %1506 = vdwg.mxu0
        %v1507 = vadd.f32 %v1339, %v1502
        %p1508 = scmp.eq.s32.totalorder %s32, 1
        %p1509 = scmp.ne.s32.totalorder %s32, 1
        // Predicated region
        $region97: #{tpu_custom_call.1} parent=55 // pred_check
          %p1510 = pneg %p1509
        $region98: #{tpu_custom_call.1} parent=55 // pred_check_branch
          %1512 = sbr.rel (%p1510) target = $region100
        $region99: #{tpu_custom_call.1} parent=55 // pred_region
          %1513 = vst.msk [vmem:[%s596] sm:$0xff] %vm608, %v1507
        $region100: #{tpu_custom_call.1} parent=55 // pred_fallthru
          _
        // Predicated region
        $region101: #{tpu_custom_call.1} parent=55 // pred_check
          %p1514 = pneg %p1508
        $region102: #{tpu_custom_call.1} parent=55 // pred_check_branch
          %1516 = sbr.rel (%p1514) target = $region104
        $region103: #{tpu_custom_call.1} parent=55 // pred_region
          %v1517 = vld [vmem:[#allocation13] sm:$0x1]
          %v1518 = vmul.f32 %v1507, %v1507
          %v1519 = vsel %vm608, %v1518, 0.0
          %1520 = vadd.xlane.f32.xlu0 %v1519
          %v1521 = vpop.xlane.xlu0 %1520
          %v1522 = vmul.f32 %v1521, %v612
          %v1523 = vadd.f32 %v1522, 1e-06
          %v1524 = vrsqrt.pop %v1523
          %v1525 = vmul.f32 %v1507, %v1524
          %v1527 = vlaneseq
          %v1528 = vshrl.u32 %v1527, 7
          %v1529 = vsub.s32 0, %v1528
          %v1530 = vrot.slane %v1517, %v1529
          %v1532 = vmul.f32 %v1525, %v1530
          %1533 = vst.msk [vmem:[%s596] sm:$0xff] %vm608, %v1532
        $region104: #{tpu_custom_call.1} parent=55 // pred_fallthru
          _
        %s1534 = sand.u32 %s271, 1
        %s1535 = scalar_lea.sflag [#allocation4], %s1534
        %s1536 = sand.u32 %s271, 1
        %s1537 = smul.addr %s1536, 8
        %s1538 = scalar_lea.vmem [#allocation14], %s1537
        // Predicated region
        $region105: #{tpu_custom_call.1} parent=55 // pred_check
          %p1539 = pneg %p281
        $region106: #{tpu_custom_call.1} parent=55 // pred_check_branch
          %1541 = sbr.rel (%p1539) target = $region108
        $region107: #{tpu_custom_call.1} parent=55 // pred_region
          %s1543 = ssub.s32 128, 128
          %1544 = vsyncadd %s1535, %s1543
          %s1545 = smul.addr %s31, 128
          %s1546 = scalar_lea.hbm %s9, %s1545
          %s1548 = sshll.u32 %s1538, 4
          %s1549 = int_to_ptr.vmem [resolvable:$true] %s1548
          %1551 = dma.vmem_to_hbm [thread:$0]  %s1549, 128, %s1546, %s1535
        $region108: #{tpu_custom_call.1} parent=55 // pred_fallthru
          _
      $region56: #{tpu_custom_call.1} parent=5 // pred_fallthru
        _
      %p1552 = scmp.le.s32.totalorder 2, %s22
      // Predicated region
      $region109: #{tpu_custom_call.1} parent=5 // pred_check
        %p1553 = pneg %p1552
      $region110: #{tpu_custom_call.1} parent=5 // pred_check_branch
        %1555 = sbr.rel (%p1553) target = $region112
      $region111: #{tpu_custom_call.1} parent=5 // pred_region
        %s1556 = ssub.s32 %s22, 2
        // Predicated region
        $region113: #{tpu_custom_call.1} parent=111 // pred_check
          %p1557 = pneg %p287
        $region114: #{tpu_custom_call.1} parent=111 // pred_check_branch
          %1559 = sbr.rel (%p1557) target = $region116
        $region115: #{tpu_custom_call.1} parent=111 // pred_region
          %s1560 = sand.u32 %s272, 1
          %s1561 = scalar_lea.sflag [#allocation4], %s1560
          %s1562 = sand.u32 %s272, 1
          %s1563 = smul.addr %s1562, 8
          %s1564 = scalar_lea.vmem [#allocation14], %s1563
          %1565 = dma.done %s1561, 128
        $region116: #{tpu_custom_call.1} parent=111 // pred_fallthru
          _
      $region112: #{tpu_custom_call.1} parent=5 // pred_fallthru
        _
    $region6: #{tpu_custom_call.1} parent=1 // loop_footer
      %s26 = sadd.s32 1, %s22
    $region7: #{tpu_custom_call.1} parent=1 // loop_footer_branch
      %21 = sbr.rel target = $region3
    $region8: #{tpu_custom_call.1} parent=1 // loop_exit
      _
    %1566 = vsyncpa [#allocation3], 1
    %s1567 = scalar_lea.sflag [#allocation3], 1
    %1568 = vsyncpa %s1567, 1
    %1569 = vsyncpa [#allocation6], 1
    %1570 = vsyncpa [#allocation4], 1
    %s1571 = scalar_lea.sflag [#allocation4], 1
    %1572 = vsyncpa %s1571, 1

</llo_original>
